<compile_context>
chip_gen: v5e
topology: v5e:2x2
jax: 0.10.0
libtpu: 0.0.40
codegen_flags: <defaults>
</compile_context>

<pallas_src>
import functools

import jax
import jax.numpy as jnp
from jax.experimental import pallas as pl
from jax.experimental.pallas import tpu as pltpu


LEAKY_SLOPE = 0.2
BN_EPS = 0.8
TN = 512                     # head output-column tile / output padding unit

# Row indices inside the packed f32 parameter slab (one DMA instead of 11).
(ROW_B1,
 ROW_B2, ROW_G2, ROW_BE2,
 ROW_B3, ROW_G3, ROW_BE3,
 ROW_B4, ROW_G4, ROW_BE4,
 ROW_B5) = range(11)
SLAB_ROWS = 11


def _round_up(x, m):
    return (x + m - 1) // m * m


def _vmem_budget_bytes():
    """Per-generation VMEM budget: ~3/4 of physical (48 MiB v7x, 96 MiB v5e/v6e)."""
    cap = None
    try:
        cap = getattr(pltpu.get_tpu_info(), "vmem_capacity_bytes", None)
    except Exception:
        cap = None
    if not cap:
        cap = 64 * 1024 * 1024          # conservative (v7x-sized) fallback
    return int(cap) * 3 // 4


def _resident_vmem_bytes(batch, dzp, hidden, out_padded, slab_width):
    """Rough VMEM footprint of the whole-resident fused kernel (with slack)."""
    h = hidden
    w_bytes = 2 * (dzp * h + h * 2 * h + 2 * h * 4 * h + 4 * h * 8 * h
                   + 8 * h * out_padded)                    # bf16 weights
    x_bytes = 4 * batch * dzp
    slab_bytes = 4 * 16 * slab_width
    out_bytes = 4 * batch * out_padded
    act_bytes = 4 * batch * 8 * h * 6                       # live f32 temporaries
    return w_bytes + x_bytes + slab_bytes + out_bytes + act_bytes


# ---------------------------------------------------------------------------
# Kernels
# ---------------------------------------------------------------------------

def _trunk_compute(x_ref, w1_ref, w2_ref, w3_ref, w4_ref, slab_ref, hidden):
    """Blocks 1-4: Linear (+ folded training-mode BN) + LeakyReLU. Returns f32 h."""
    h1, h2, h4, h8 = hidden, 2 * hidden, 4 * hidden, 8 * hidden

    def prow(r, width):                       # (1, width) slice of the param slab
        return slab_ref[r:r + 1, :width]

    def linear(h, w_ref, b):
        # bf16 operands on the MXU, f32 accumulate; bias broadcasts over batch.
        return jnp.dot(h.astype(jnp.bfloat16), w_ref[...],
                       preferred_element_type=jnp.float32) + b

    def leaky(h):
        return jnp.where(h >= 0.0, h, LEAKY_SLOPE * h)

    def batch_norm(h, g, be):
        # Training-mode BN (batch mean, biased variance, eps=0.8) folded into one
        # scale/shift; one-pass variance E[x^2] - mean^2 (eps=0.8 >> cancellation).
        mean = jnp.mean(h, axis=0, keepdims=True)
        var = jnp.mean(h * h, axis=0, keepdims=True) - mean * mean
        scale = jax.lax.rsqrt(var + BN_EPS) * g
        shift = be - mean * scale
        return h * scale + shift

    h = x_ref[...].astype(jnp.float32)
    h = leaky(linear(h, w1_ref, prow(ROW_B1, h1)))                       # Block1
    h = leaky(batch_norm(linear(h, w2_ref, prow(ROW_B2, h2)),
                         prow(ROW_G2, h2), prow(ROW_BE2, h2)))           # Block2
    h = leaky(batch_norm(linear(h, w3_ref, prow(ROW_B3, h4)),
                         prow(ROW_G3, h4), prow(ROW_BE3, h4)))           # Block3
    h = leaky(batch_norm(linear(h, w4_ref, prow(ROW_B4, h8)),
                         prow(ROW_G4, h8), prow(ROW_BE4, h8)))           # Block4
    return h


def _fused_resident_kernel(x_ref, w1_ref, w2_ref, w3_ref, w4_ref, slab_ref,
                           w5_ref, out_ref, *, hidden, out_padded):
    """Whole-resident fused generator: trunk + head in one shot, no grid."""
    h = _trunk_compute(x_ref, w1_ref, w2_ref, w3_ref, w4_ref, slab_ref, hidden)
    acc = jnp.dot(h.astype(jnp.bfloat16), w5_ref[...],
                  preferred_element_type=jnp.float32)
    b5 = slab_ref[ROW_B5:ROW_B5 + 1, :out_padded]
    out_ref[...] = jnp.tanh(acc + b5).astype(out_ref.dtype)


def _fused_tiled_kernel(x_ref, w1_ref, w2_ref, w3_ref, w4_ref, slab_ref,
                        w5_ref, out_ref, h4_ref, *, hidden, tn):
    """Fused generator with the head tiled over output columns.

    Trunk runs once (j == 0) into the persistent VMEM scratch h4_ref; the grid
    axis is "arbitrary" (sequential on one core), so this is correct on v7x too.
    """
    j = pl.program_id(0)

    @pl.when(j == 0)
    def _():
        h = _trunk_compute(x_ref, w1_ref, w2_ref, w3_ref, w4_ref, slab_ref, hidden)
        h4_ref[...] = h.astype(h4_ref.dtype)

    col0 = pl.multiple_of(j * tn, tn)
    b5 = slab_ref[pl.ds(ROW_B5, 1), pl.ds(col0, tn)]
    acc = jnp.dot(h4_ref[...], w5_ref[...], preferred_element_type=jnp.float32)
    out_ref[...] = jnp.tanh(acc + b5).astype(out_ref.dtype)


# ---------------------------------------------------------------------------
# Wrapper
# ---------------------------------------------------------------------------

@functools.partial(jax.jit, static_argnames=("img_size", "force_tiled"))
def generator_forward(x, params, img_size, force_tiled=False):
    """x: (B, dim_z) float32. Returns (B, 1, img_size, img_size) float32."""
    w1, w2, w3, w4, w5, slab = params
    batch = x.shape[0]
    dzp = w1.shape[0]                 # dim_z padded to 128
    hidden = w1.shape[1]
    hidden8 = w4.shape[1]             # 8 * hidden
    out_padded = w5.shape[1]          # img*img padded to a multiple of TN
    slab_width = slab.shape[1]
    out_size = img_size * img_size

    # Zero-pad z to the lane-dense padded dim_z (matches w1's zero rows).
    if x.shape[1] != dzp:
        x = jnp.pad(x, ((0, 0), (0, dzp - x.shape[1])))

    budget = _vmem_budget_bytes()
    resident = (not force_tiled) and (
        _resident_vmem_bytes(batch, dzp, hidden, out_padded, slab_width) <= budget)

    flops = 2 * batch * (dzp * hidden + hidden * 2 * hidden + 2 * hidden * 4 * hidden
                         + 4 * hidden * 8 * hidden + hidden8 * out_padded)
    bytes_accessed = (4 * batch * dzp
                      + 2 * (dzp * hidden + hidden * 2 * hidden
                             + 2 * hidden * 4 * hidden + 4 * hidden * 8 * hidden
                             + hidden8 * out_padded)
                      + 4 * SLAB_ROWS * slab_width
                      + 4 * batch * out_padded)
    cost = pl.CostEstimate(flops=flops,
                           transcendentals=batch * out_padded,
                           bytes_accessed=bytes_accessed)

    vmem_spec = pl.BlockSpec(memory_space=pltpu.MemorySpace.VMEM)

    if resident:
        out2d = pl.pallas_call(
            functools.partial(_fused_resident_kernel,
                              hidden=hidden, out_padded=out_padded),
            out_shape=jax.ShapeDtypeStruct((batch, out_padded), jnp.float32),
            in_specs=[vmem_spec] * 7,
            out_specs=vmem_spec,
            compiler_params=pltpu.CompilerParams(vmem_limit_bytes=budget),
            cost_estimate=cost,
        )(x, w1, w2, w3, w4, slab, w5)
    else:
        grid_n = out_padded // TN
        out2d = pl.pallas_call(
            functools.partial(_fused_tiled_kernel, hidden=hidden, tn=TN),
            out_shape=jax.ShapeDtypeStruct((batch, out_padded), jnp.float32),
            grid=(grid_n,),
            in_specs=[vmem_spec] * 6
                     + [pl.BlockSpec((hidden8, TN), lambda j: (0, j))],   # w5 streamed
            out_specs=pl.BlockSpec((batch, TN), lambda j: (0, j)),
            scratch_shapes=[pltpu.VMEM((batch, hidden8), jnp.bfloat16)],  # h4
            compiler_params=pltpu.CompilerParams(
                dimension_semantics=("arbitrary",),   # scratch reused across steps
                vmem_limit_bytes=budget),
            cost_estimate=cost,
        )(x, w1, w2, w3, w4, slab, w5)

    # Drop lane padding, then PyTorch view(B, -1, img, img) -> (B, 1, H, W).
    out2d = out2d[:, :out_size]
    return out2d.reshape(batch, -1, img_size, img_size)


# ---------------------------------------------------------------------------
# Params + pure-JAX reference (mirrors the kernel's bf16 matmul operands)
# ---------------------------------------------------------------------------

def init_params(key, dim_z, hidden, img_size):
    """PyTorch-default-style init (uniform +-1/sqrt(fan_in); BN gamma=1, beta=0).

    Kernel layout decided here, once:
      * Linear weights pre-transposed to (in, out), bf16; w1 rows zero-padded to
        128, w5 cols zero-padded to a multiple of TN.
      * All biases / BN gammas / betas packed into one (11, slab_width) f32 slab.
    """
    out_size = img_size * img_size
    out_padded = _round_up(out_size, TN)
    dzp = _round_up(dim_z, 128)
    slab_width = _round_up(max(8 * hidden, out_padded), 128)

    def uniform(k, shape, fan_in):
        bound = 1.0 / float(fan_in) ** 0.5
        return jax.random.uniform(k, shape, jnp.float32, -bound, bound)

    keys = jax.random.split(key, 10)

    w1 = uniform(keys[0], (dim_z, hidden), dim_z)
    w1 = jnp.pad(w1, ((0, dzp - dim_z), (0, 0))).astype(jnp.bfloat16)
    w2 = uniform(keys[2], (hidden, 2 * hidden), hidden).astype(jnp.bfloat16)
    w3 = uniform(keys[4], (2 * hidden, 4 * hidden), 2 * hidden).astype(jnp.bfloat16)
    w4 = uniform(keys[6], (4 * hidden, 8 * hidden), 4 * hidden).astype(jnp.bfloat16)
    w5 = uniform(keys[8], (8 * hidden, out_size), 8 * hidden)
    w5 = jnp.pad(w5, ((0, 0), (0, out_padded - out_size))).astype(jnp.bfloat16)

    b1 = uniform(keys[1], (hidden,), dim_z)
    b2 = uniform(keys[3], (2 * hidden,), hidden)
    b3 = uniform(keys[5], (4 * hidden,), 2 * hidden)
    b4 = uniform(keys[7], (8 * hidden,), 4 * hidden)
    b5 = uniform(keys[9], (out_size,), 8 * hidden)

    slab = jnp.zeros((SLAB_ROWS, slab_width), jnp.float32)

    def put(s, row, vec):
        return s.at[row, :vec.shape[0]].set(vec)

    slab = put(slab, ROW_B1, b1)
    slab = put(slab, ROW_B2, b2)
    slab = put(slab, ROW_B3, b3)
    slab = put(slab, ROW_B4, b4)
    slab = put(slab, ROW_B5, b5)
    slab = put(slab, ROW_G2, jnp.ones((2 * hidden,), jnp.float32))   # BN gammas
    slab = put(slab, ROW_G3, jnp.ones((4 * hidden,), jnp.float32))
    slab = put(slab, ROW_G4, jnp.ones((8 * hidden,), jnp.float32))
    # ROW_BE2 / ROW_BE3 / ROW_BE4 (BN betas) stay zero.
    return (w1, w2, w3, w4, w5, slab)


def reference_forward(x, params, img_size):
    """Pure-JAX reference using the same bf16-operand / f32-accumulate matmuls."""
    w1, w2, w3, w4, w5, slab = params
    dzp = w1.shape[0]
    hidden = w1.shape[1]
    out_padded = w5.shape[1]
    out_size = img_size * img_size
    if x.shape[1] != dzp:
        x = jnp.pad(x, ((0, 0), (0, dzp - x.shape[1])))

    def row(r, width):
        return slab[r:r + 1, :width]

    def dot16(h, w):
        return jnp.dot(h.astype(jnp.bfloat16), w, preferred_element_type=jnp.float32)

    def leaky(h):
        return jnp.where(h >= 0.0, h, LEAKY_SLOPE * h)

    def bn(h, g, be):
        mean = jnp.mean(h, axis=0, keepdims=True)
        var = jnp.mean(h * h, axis=0, keepdims=True) - mean * mean
        scale = jax.lax.rsqrt(var + BN_EPS) * g
        return h * scale + (be - mean * scale)

    h = leaky(dot16(x, w1) + row(ROW_B1, hidden))
    h = leaky(bn(dot16(h, w2) + row(ROW_B2, 2 * hidden),
                 row(ROW_G2, 2 * hidden), row(ROW_BE2, 2 * hidden)))
    h = leaky(bn(dot16(h, w3) + row(ROW_B3, 4 * hidden),
                 row(ROW_G3, 4 * hidden), row(ROW_BE3, 4 * hidden)))
    h = leaky(bn(dot16(h, w4) + row(ROW_B4, 8 * hidden),
                 row(ROW_G4, 8 * hidden), row(ROW_BE4, 8 * hidden)))
    o = jnp.tanh(dot16(h, w5) + row(ROW_B5, out_padded))
    o = o[:, :out_size]
    return o.reshape(o.shape[0], -1, img_size, img_size)


if __name__ == "__main__":
    # Small but MXU-friendly shapes consistent with the module's forward.
    BATCH = 64
    DIM_Z = 64
    HIDDEN = 32
    IMG_SIZE = 16            # out_size = 256 -> padded to 512

    key = jax.random.PRNGKey(0)
    k_x, k_p = jax.random.split(key)

    x = jax.random.normal(k_x, (BATCH, DIM_Z), jnp.float32)
    params = init_params(k_p, DIM_Z, HIDDEN, IMG_SIZE)

    # Path 1: whole-resident fused kernel (the common case).
    out = generator_forward(x, params, IMG_SIZE)
    out = jax.block_until_ready(out)
    assert out.shape == (BATCH, 1, IMG_SIZE, IMG_SIZE), out.shape
    ref = reference_forward(x, params, IMG_SIZE)
    max_err = float(jnp.max(jnp.abs(out - ref)))
    assert max_err < 1e-2, max_err

    # Path 2: column-tiled head (forced) to validate the streamed fallback.
    IMG2 = 28                # out_size = 784 -> padded to 1024, 2 grid steps
    params2 = init_params(k_p, DIM_Z, HIDDEN, IMG2)
    out2 = generator_forward(x, params2, IMG2, force_tiled=True)
    out2 = jax.block_until_ready(out2)
    assert out2.shape == (BATCH, 1, IMG2, IMG2), out2.shape
    ref2 = reference_forward(x, params2, IMG2)
    max_err2 = float(jnp.max(jnp.abs(out2 - ref2)))
    assert max_err2 < 1e-2, max_err2

    print("KERNEL_OK")
</pallas_src>

<mosaic_0001>
module attributes {stable_mosaic.version = 11 : i64} {
  func.func @_fused_resident_kernel(%arg0: memref<64x128xf32, #tpu.memory_space<vmem>>, %arg1: memref<128x32xbf16, #tpu.memory_space<vmem>>, %arg2: memref<32x64xbf16, #tpu.memory_space<vmem>>, %arg3: memref<64x128xbf16, #tpu.memory_space<vmem>>, %arg4: memref<128x256xbf16, #tpu.memory_space<vmem>>, %arg5: memref<11x512xf32, #tpu.memory_space<vmem>>, %arg6: memref<256x512xbf16, #tpu.memory_space<vmem>>, %arg7: memref<64x512xf32, #tpu.memory_space<vmem>>) attributes {dimension_semantics = [], scalar_prefetch = 0 : i64, scratch_operands = 0 : i64, tpu.core_type = #tpu.core_type<tc>} {
    %c0 = arith.constant 0 : index
    %c0_0 = arith.constant 0 : index
    %0 = vector.load %arg0[%c0, %c0_0] : memref<64x128xf32, #tpu.memory_space<vmem>>, vector<64x128xf32>
    %c0_1 = arith.constant 0 : index
    %c0_2 = arith.constant 0 : index
    %1 = vector.load %arg5[%c0_1, %c0_2] : memref<11x512xf32, #tpu.memory_space<vmem>>, vector<1x32xf32>
    %2 = arith.truncf %0 : vector<64x128xf32> to vector<64x128xbf16>
    %c0_3 = arith.constant 0 : index
    %c0_4 = arith.constant 0 : index
    %3 = vector.load %arg1[%c0_3, %c0_4] : memref<128x32xbf16, #tpu.memory_space<vmem>>, vector<128x32xbf16>
    %cst = arith.constant dense<0.000000e+00> : vector<64x32xf32>
    %4 = tpu.matmul %2, %3, %cst {dimension_numbers = #tpu.dot_dimension_numbers<[1], [0], [0], [1], [0, 0, 1, 1], [], []>} : vector<64x128xbf16>, vector<128x32xbf16>, vector<64x32xf32> -> vector<64x32xf32>
    %5 = vector.broadcast %1 : vector<1x32xf32> to vector<64x32xf32>
    %6 = arith.addf %4, %5 : vector<64x32xf32>
    %cst_5 = arith.constant 0.000000e+00 : f32
    %7 = vector.broadcast %cst_5 : f32 to vector<64x32xf32>
    %8 = arith.cmpf oge, %6, %7 : vector<64x32xf32>
    %cst_6 = arith.constant 2.000000e-01 : f32
    %9 = vector.broadcast %cst_6 : f32 to vector<64x32xf32>
    %10 = arith.mulf %9, %6 : vector<64x32xf32>
    %11 = arith.select %8, %6, %10 : vector<64x32xi1>, vector<64x32xf32>
    %c1 = arith.constant 1 : index
    %c0_7 = arith.constant 0 : index
    %12 = vector.load %arg5[%c1, %c0_7] : memref<11x512xf32, #tpu.memory_space<vmem>>, vector<1x64xf32>
    %13 = arith.truncf %11 : vector<64x32xf32> to vector<64x32xbf16>
    %c0_8 = arith.constant 0 : index
    %c0_9 = arith.constant 0 : index
    %14 = vector.load %arg2[%c0_8, %c0_9] : memref<32x64xbf16, #tpu.memory_space<vmem>>, vector<32x64xbf16>
    %cst_10 = arith.constant dense<0.000000e+00> : vector<64x64xf32>
    %15 = tpu.matmul %13, %14, %cst_10 {dimension_numbers = #tpu.dot_dimension_numbers<[1], [0], [0], [1], [0, 0, 1, 1], [], []>} : vector<64x32xbf16>, vector<32x64xbf16>, vector<64x64xf32> -> vector<64x64xf32>
    %16 = vector.broadcast %12 : vector<1x64xf32> to vector<64x64xf32>
    %17 = arith.addf %15, %16 : vector<64x64xf32>
    %c2 = arith.constant 2 : index
    %c0_11 = arith.constant 0 : index
    %18 = vector.load %arg5[%c2, %c0_11] : memref<11x512xf32, #tpu.memory_space<vmem>>, vector<1x64xf32>
    %c3 = arith.constant 3 : index
    %c0_12 = arith.constant 0 : index
    %19 = vector.load %arg5[%c3, %c0_12] : memref<11x512xf32, #tpu.memory_space<vmem>>, vector<1x64xf32>
    %cst_13 = arith.constant dense<0.000000e+00> : vector<64xf32>
    %20 = vector.multi_reduction <add>, %17, %cst_13 [0] : vector<64x64xf32> to vector<64xf32>
    %21 = vector.shape_cast %20 : vector<64xf32> to vector<1x64xf32>
    %cst_14 = arith.constant 6.400000e+01 : f32
    %22 = vector.broadcast %cst_14 : f32 to vector<1x64xf32>
    %23 = arith.divf %21, %22 : vector<1x64xf32>
    %24 = arith.mulf %17, %17 : vector<64x64xf32>
    %cst_15 = arith.constant dense<0.000000e+00> : vector<64xf32>
    %25 = vector.multi_reduction <add>, %24, %cst_15 [0] : vector<64x64xf32> to vector<64xf32>
    %26 = vector.shape_cast %25 : vector<64xf32> to vector<1x64xf32>
    %cst_16 = arith.constant 6.400000e+01 : f32
    %27 = vector.broadcast %cst_16 : f32 to vector<1x64xf32>
    %28 = arith.divf %26, %27 : vector<1x64xf32>
    %29 = arith.mulf %23, %23 : vector<1x64xf32>
    %30 = arith.subf %28, %29 : vector<1x64xf32>
    %cst_17 = arith.constant 8.000000e-01 : f32
    %31 = vector.broadcast %cst_17 : f32 to vector<1x64xf32>
    %32 = arith.addf %30, %31 : vector<1x64xf32>
    %33 = math.rsqrt %32 : vector<1x64xf32>
    %34 = arith.mulf %33, %18 : vector<1x64xf32>
    %35 = arith.mulf %23, %34 : vector<1x64xf32>
    %36 = arith.subf %19, %35 : vector<1x64xf32>
    %37 = vector.broadcast %34 : vector<1x64xf32> to vector<64x64xf32>
    %38 = arith.mulf %17, %37 : vector<64x64xf32>
    %39 = vector.broadcast %36 : vector<1x64xf32> to vector<64x64xf32>
    %40 = arith.addf %38, %39 : vector<64x64xf32>
    %cst_18 = arith.constant 0.000000e+00 : f32
    %41 = vector.broadcast %cst_18 : f32 to vector<64x64xf32>
    %42 = arith.cmpf oge, %40, %41 : vector<64x64xf32>
    %cst_19 = arith.constant 2.000000e-01 : f32
    %43 = vector.broadcast %cst_19 : f32 to vector<64x64xf32>
    %44 = arith.mulf %43, %40 : vector<64x64xf32>
    %45 = arith.select %42, %40, %44 : vector<64x64xi1>, vector<64x64xf32>
    %c4 = arith.constant 4 : index
    %c0_20 = arith.constant 0 : index
    %46 = vector.load %arg5[%c4, %c0_20] : memref<11x512xf32, #tpu.memory_space<vmem>>, vector<1x128xf32>
    %47 = arith.truncf %45 : vector<64x64xf32> to vector<64x64xbf16>
    %c0_21 = arith.constant 0 : index
    %c0_22 = arith.constant 0 : index
    %48 = vector.load %arg3[%c0_21, %c0_22] : memref<64x128xbf16, #tpu.memory_space<vmem>>, vector<64x128xbf16>
    %cst_23 = arith.constant dense<0.000000e+00> : vector<64x128xf32>
    %49 = tpu.matmul %47, %48, %cst_23 {dimension_numbers = #tpu.dot_dimension_numbers<[1], [0], [0], [1], [0, 0, 1, 1], [], []>} : vector<64x64xbf16>, vector<64x128xbf16>, vector<64x128xf32> -> vector<64x128xf32>
    %50 = vector.broadcast %46 : vector<1x128xf32> to vector<64x128xf32>
    %51 = arith.addf %49, %50 : vector<64x128xf32>
    %c5 = arith.constant 5 : index
    %c0_24 = arith.constant 0 : index
    %52 = vector.load %arg5[%c5, %c0_24] : memref<11x512xf32, #tpu.memory_space<vmem>>, vector<1x128xf32>
    %c6 = arith.constant 6 : index
    %c0_25 = arith.constant 0 : index
    %53 = vector.load %arg5[%c6, %c0_25] : memref<11x512xf32, #tpu.memory_space<vmem>>, vector<1x128xf32>
    %cst_26 = arith.constant dense<0.000000e+00> : vector<128xf32>
    %54 = vector.multi_reduction <add>, %51, %cst_26 [0] : vector<64x128xf32> to vector<128xf32>
    %55 = vector.shape_cast %54 : vector<128xf32> to vector<1x128xf32>
    %cst_27 = arith.constant 6.400000e+01 : f32
    %56 = vector.broadcast %cst_27 : f32 to vector<1x128xf32>
    %57 = arith.divf %55, %56 : vector<1x128xf32>
    %58 = arith.mulf %51, %51 : vector<64x128xf32>
    %cst_28 = arith.constant dense<0.000000e+00> : vector<128xf32>
    %59 = vector.multi_reduction <add>, %58, %cst_28 [0] : vector<64x128xf32> to vector<128xf32>
    %60 = vector.shape_cast %59 : vector<128xf32> to vector<1x128xf32>
    %cst_29 = arith.constant 6.400000e+01 : f32
    %61 = vector.broadcast %cst_29 : f32 to vector<1x128xf32>
    %62 = arith.divf %60, %61 : vector<1x128xf32>
    %63 = arith.mulf %57, %57 : vector<1x128xf32>
    %64 = arith.subf %62, %63 : vector<1x128xf32>
    %cst_30 = arith.constant 8.000000e-01 : f32
    %65 = vector.broadcast %cst_30 : f32 to vector<1x128xf32>
    %66 = arith.addf %64, %65 : vector<1x128xf32>
    %67 = math.rsqrt %66 : vector<1x128xf32>
    %68 = arith.mulf %67, %52 : vector<1x128xf32>
    %69 = arith.mulf %57, %68 : vector<1x128xf32>
    %70 = arith.subf %53, %69 : vector<1x128xf32>
    %71 = vector.broadcast %68 : vector<1x128xf32> to vector<64x128xf32>
    %72 = arith.mulf %51, %71 : vector<64x128xf32>
    %73 = vector.broadcast %70 : vector<1x128xf32> to vector<64x128xf32>
    %74 = arith.addf %72, %73 : vector<64x128xf32>
    %cst_31 = arith.constant 0.000000e+00 : f32
    %75 = vector.broadcast %cst_31 : f32 to vector<64x128xf32>
    %76 = arith.cmpf oge, %74, %75 : vector<64x128xf32>
    %cst_32 = arith.constant 2.000000e-01 : f32
    %77 = vector.broadcast %cst_32 : f32 to vector<64x128xf32>
    %78 = arith.mulf %77, %74 : vector<64x128xf32>
    %79 = arith.select %76, %74, %78 : vector<64x128xi1>, vector<64x128xf32>
    %c7 = arith.constant 7 : index
    %c0_33 = arith.constant 0 : index
    %80 = vector.load %arg5[%c7, %c0_33] : memref<11x512xf32, #tpu.memory_space<vmem>>, vector<1x256xf32>
    %81 = arith.truncf %79 : vector<64x128xf32> to vector<64x128xbf16>
    %c0_34 = arith.constant 0 : index
    %c0_35 = arith.constant 0 : index
    %82 = vector.load %arg4[%c0_34, %c0_35] : memref<128x256xbf16, #tpu.memory_space<vmem>>, vector<128x256xbf16>
    %cst_36 = arith.constant dense<0.000000e+00> : vector<64x256xf32>
    %83 = tpu.matmul %81, %82, %cst_36 {dimension_numbers = #tpu.dot_dimension_numbers<[1], [0], [0], [1], [0, 0, 1, 1], [], []>} : vector<64x128xbf16>, vector<128x256xbf16>, vector<64x256xf32> -> vector<64x256xf32>
    %84 = vector.broadcast %80 : vector<1x256xf32> to vector<64x256xf32>
    %85 = arith.addf %83, %84 : vector<64x256xf32>
    %c8 = arith.constant 8 : index
    %c0_37 = arith.constant 0 : index
    %86 = vector.load %arg5[%c8, %c0_37] : memref<11x512xf32, #tpu.memory_space<vmem>>, vector<1x256xf32>
    %c9 = arith.constant 9 : index
    %c0_38 = arith.constant 0 : index
    %87 = vector.load %arg5[%c9, %c0_38] : memref<11x512xf32, #tpu.memory_space<vmem>>, vector<1x256xf32>
    %cst_39 = arith.constant dense<0.000000e+00> : vector<256xf32>
    %88 = vector.multi_reduction <add>, %85, %cst_39 [0] : vector<64x256xf32> to vector<256xf32>
    %89 = vector.shape_cast %88 : vector<256xf32> to vector<1x256xf32>
    %cst_40 = arith.constant 6.400000e+01 : f32
    %90 = vector.broadcast %cst_40 : f32 to vector<1x256xf32>
    %91 = arith.divf %89, %90 : vector<1x256xf32>
    %92 = arith.mulf %85, %85 : vector<64x256xf32>
    %cst_41 = arith.constant dense<0.000000e+00> : vector<256xf32>
    %93 = vector.multi_reduction <add>, %92, %cst_41 [0] : vector<64x256xf32> to vector<256xf32>
    %94 = vector.shape_cast %93 : vector<256xf32> to vector<1x256xf32>
    %cst_42 = arith.constant 6.400000e+01 : f32
    %95 = vector.broadcast %cst_42 : f32 to vector<1x256xf32>
    %96 = arith.divf %94, %95 : vector<1x256xf32>
    %97 = arith.mulf %91, %91 : vector<1x256xf32>
    %98 = arith.subf %96, %97 : vector<1x256xf32>
    %cst_43 = arith.constant 8.000000e-01 : f32
    %99 = vector.broadcast %cst_43 : f32 to vector<1x256xf32>
    %100 = arith.addf %98, %99 : vector<1x256xf32>
    %101 = math.rsqrt %100 : vector<1x256xf32>
    %102 = arith.mulf %101, %86 : vector<1x256xf32>
    %103 = arith.mulf %91, %102 : vector<1x256xf32>
    %104 = arith.subf %87, %103 : vector<1x256xf32>
    %105 = vector.broadcast %102 : vector<1x256xf32> to vector<64x256xf32>
    %106 = arith.mulf %85, %105 : vector<64x256xf32>
    %107 = vector.broadcast %104 : vector<1x256xf32> to vector<64x256xf32>
    %108 = arith.addf %106, %107 : vector<64x256xf32>
    %cst_44 = arith.constant 0.000000e+00 : f32
    %109 = vector.broadcast %cst_44 : f32 to vector<64x256xf32>
    %110 = arith.cmpf oge, %108, %109 : vector<64x256xf32>
    %cst_45 = arith.constant 2.000000e-01 : f32
    %111 = vector.broadcast %cst_45 : f32 to vector<64x256xf32>
    %112 = arith.mulf %111, %108 : vector<64x256xf32>
    %113 = arith.select %110, %108, %112 : vector<64x256xi1>, vector<64x256xf32>
    %114 = arith.truncf %113 : vector<64x256xf32> to vector<64x256xbf16>
    %c0_46 = arith.constant 0 : index
    %c0_47 = arith.constant 0 : index
    %115 = vector.load %arg6[%c0_46, %c0_47] : memref<256x512xbf16, #tpu.memory_space<vmem>>, vector<256x512xbf16>
    %cst_48 = arith.constant dense<0.000000e+00> : vector<64x512xf32>
    %116 = tpu.matmul %114, %115, %cst_48 {dimension_numbers = #tpu.dot_dimension_numbers<[1], [0], [0], [1], [0, 0, 1, 1], [], []>} : vector<64x256xbf16>, vector<256x512xbf16>, vector<64x512xf32> -> vector<64x512xf32>
    %c10 = arith.constant 10 : index
    %c0_49 = arith.constant 0 : index
    %117 = vector.load %arg5[%c10, %c0_49] : memref<11x512xf32, #tpu.memory_space<vmem>>, vector<1x512xf32>
    %118 = vector.broadcast %117 : vector<1x512xf32> to vector<64x512xf32>
    %119 = arith.addf %116, %118 : vector<64x512xf32>
    %120 = math.tanh %119 : vector<64x512xf32>
    %c0_50 = arith.constant 0 : index
    %c0_51 = arith.constant 0 : index
    %121 = vector.load %arg7[%c0_50, %c0_51] : memref<64x512xf32, #tpu.memory_space<vmem>>, vector<64x512xf32>
    tpu.vector_store %arg7[%c0_50, %c0_51], %120 {strides = array<i32>} : memref<64x512xf32, #tpu.memory_space<vmem>>, vector<64x512xf32>,
    return
  }
}

</mosaic_0001>

<llo_original>
// kernel: generator_forward.1
$region0: #{generator_forward.1}
  #allocation0 [shape = 'u32[]', space=smem, size = 0x4, offset = 0x4, fixed_abs, tag = 'smem constant byte address 0x4 - core index']
  #allocation1 [shape = 'u32[72,128]{1,0:T(1,128)}', space=vmem, size = 0x9000, scoped, tag = 'internal scratch']
  %s0 = inlined_call_operand.vmem [shape: f32[64,128], index: 0, kind: input, shape index: {}]
  %s1 = inlined_call_operand.vmem [shape: bf16[128,32], index: 1, kind: input, shape index: {}]
  %s2 = inlined_call_operand.vmem [shape: bf16[32,64], index: 2, kind: input, shape index: {}]
  %s3 = inlined_call_operand.hbm [shape: bf16[64,128], index: 3, kind: input, shape index: {}]
  %s4 = inlined_call_operand.vmem [shape: bf16[128,256], index: 4, kind: input, shape index: {}]
  %s5 = inlined_call_operand.vmem [shape: f32[11,512], index: 5, kind: input, shape index: {}]
  %s6 = inlined_call_operand.hbm [shape: bf16[256,512], index: 6, kind: input, shape index: {}]
  %s7 = inlined_call_operand.vmem [shape: f32[64,512], index: 7, kind: output, shape index: {}]
  %s8 = sld [smem:[#allocation0]]
  $region46: #{generator_forward.1} parent=0
    _
  %s10 = ssub.s32 1, %s8
  %s11 = scalar_select 0, %s10, %s8
  $region1: #{generator_forward.1} parent=0
    #allocation2 [shape = 'u8[16384]{0}', space=vmem, size = 0x4000, scoped, tag = 'input window, operand 3, single buffered']
    #allocation3 [shape = 's32[1]{0}', space=sflag, size = 0x4, scoped, tag = 'scoped memory for generator_forward.1']
    #allocation4 [shape = 'u8[262144]{0}', space=vmem, size = 0x40000, scoped, tag = 'input window, operand 6, single buffered']
    #allocation5 [shape = 's32[1]{0}', space=sflag, size = 0x4, scoped, tag = 'scoped memory for generator_forward.1']
    %12 = vsyncpa [#allocation3], 0
    %13 = vsyncpa [#allocation5], 0
    // Predicated region
    $region2: #{generator_forward.1} parent=1 // pred_check
      _
    $region3: #{generator_forward.1} parent=1 // pred_check_branch
      %15 = sbr.rel (0) target = $region5
    $region4: #{generator_forward.1} parent=1 // pred_region
      _
    $region5: #{generator_forward.1} parent=1 // pred_fallthru
      _
    // Predicated region
    $region6: #{generator_forward.1} parent=1 // pred_check
      _
    $region7: #{generator_forward.1} parent=1 // pred_check_branch
      %17 = sbr.rel (0) target = $region9
    $region8: #{generator_forward.1} parent=1 // pred_region
      _
    $region9: #{generator_forward.1} parent=1 // pred_fallthru
      _
    // Predicated region
    $region10: #{generator_forward.1} parent=1 // pred_check
      _
    $region11: #{generator_forward.1} parent=1 // pred_check_branch
      %19 = sbr.rel (0) target = $region13
    $region12: #{generator_forward.1} parent=1 // pred_region
      _
    $region13: #{generator_forward.1} parent=1 // pred_fallthru
      _
    // Predicated region
    $region14: #{generator_forward.1} parent=1 // pred_check
      _
    $region15: #{generator_forward.1} parent=1 // pred_check_branch
      %21 = sbr.rel (0) target = $region17
    $region16: #{generator_forward.1} parent=1 // pred_region
      %23 = vsyncadd [#allocation3], 0
      %s24 = sshll.u32 %s3, 4
      %s25 = int_to_ptr.hbm [resolvable:$true] %s24
      %s26 = sshll.u32 [#allocation2], 4
      %s27 = int_to_ptr.vmem [resolvable:$true] %s26
      %32 = dma.hbm_to_vmem [thread:$0]  %s25, 512, %s27, [#allocation3], 64, 64, 4
    $region17: #{generator_forward.1} parent=1 // pred_fallthru
      _
    // Predicated region
    $region18: #{generator_forward.1} parent=1 // pred_check
      _
    $region19: #{generator_forward.1} parent=1 // pred_check_branch
      %34 = sbr.rel (0) target = $region21
    $region20: #{generator_forward.1} parent=1 // pred_region
      _
    $region21: #{generator_forward.1} parent=1 // pred_fallthru
      _
    // Predicated region
    $region22: #{generator_forward.1} parent=1 // pred_check
      _
    $region23: #{generator_forward.1} parent=1 // pred_check_branch
      %36 = sbr.rel (0) target = $region25
    $region24: #{generator_forward.1} parent=1 // pred_region
      _
    $region25: #{generator_forward.1} parent=1 // pred_fallthru
      _
    // Predicated region
    $region26: #{generator_forward.1} parent=1 // pred_check
      _
    $region27: #{generator_forward.1} parent=1 // pred_check_branch
      %38 = sbr.rel (0) target = $region29
    $region28: #{generator_forward.1} parent=1 // pred_region
      %40 = vsyncadd [#allocation5], 0
      %s41 = sshll.u32 %s6, 4
      %s42 = int_to_ptr.hbm [resolvable:$true] %s41
      %s43 = sshll.u32 [#allocation4], 4
      %s44 = int_to_ptr.vmem [resolvable:$true] %s43
      %49 = dma.hbm_to_vmem [thread:$0]  %s42, 8192, %s44, [#allocation5], 256, 256, 16
    $region29: #{generator_forward.1} parent=1 // pred_fallthru
      _
    // Predicated region
    $region30: #{generator_forward.1} parent=1 // pred_check
      _
    $region31: #{generator_forward.1} parent=1 // pred_check_branch
      %51 = sbr.rel (0) target = $region33
    $region32: #{generator_forward.1} parent=1 // pred_region
      %53 = dma.done [#allocation3], 512
    $region33: #{generator_forward.1} parent=1 // pred_fallthru
      _
    // Predicated region
    $region34: #{generator_forward.1} parent=1 // pred_check
      _
    $region35: #{generator_forward.1} parent=1 // pred_check_branch
      %55 = sbr.rel (0) target = $region37
    $region36: #{generator_forward.1} parent=1 // pred_region
      %57 = dma.done [#allocation5], 8192
    $region37: #{generator_forward.1} parent=1 // pred_fallthru
      _
    %v59 = vld [vmem:[%s0] sm:$0xff]
    %v60 = vld [vmem:[%s0 + $0x8] sm:$0xff]
    %v61 = vld [vmem:[%s0 + $0x10] sm:$0xff]
    %v62 = vld [vmem:[%s0 + $0x18] sm:$0xff]
    %v63 = vld [vmem:[%s0 + $0x20] sm:$0xff]
    %v64 = vld [vmem:[%s0 + $0x28] sm:$0xff]
    %v65 = vld [vmem:[%s0 + $0x30] sm:$0xff]
    %v66 = vld [vmem:[%s0 + $0x38] sm:$0xff]
    %v67 = vld [vmem:[%s5] ss:$0 sm:$0xff]
    %v68 = vpack.c.bf16 %v60, %v59
    %v69 = vpack.c.bf16 %v62, %v61
    %v70 = vpack.c.bf16 %v64, %v63
    %v71 = vpack.c.bf16 %v66, %v65
    %v72 = vld [vmem:[%s1] sm:$0xf]
    %v73 = vld [vmem:[%s1 + $0x4] sm:$0xf]
    %v74 = vld [vmem:[%s1 + $0x8] sm:$0xf]
    %v75 = vld [vmem:[%s1 + $0xc] sm:$0xf]
    %v76 = vld [vmem:[%s1 + $0x10] sm:$0xf]
    %v77 = vld [vmem:[%s1 + $0x14] sm:$0xf]
    %v78 = vld [vmem:[%s1 + $0x18] sm:$0xf]
    %v79 = vld [vmem:[%s1 + $0x1c] sm:$0xf]
    %v80 = vld [vmem:[%s1 + $0x20] sm:$0xf]
    %v81 = vld [vmem:[%s1 + $0x24] sm:$0xf]
    %v82 = vld [vmem:[%s1 + $0x28] sm:$0xf]
    %v83 = vld [vmem:[%s1 + $0x2c] sm:$0xf]
    %v84 = vld [vmem:[%s1 + $0x30] sm:$0xf]
    %v85 = vld [vmem:[%s1 + $0x34] sm:$0xf]
    %v86 = vld [vmem:[%s1 + $0x38] sm:$0xf]
    %v87 = vld [vmem:[%s1 + $0x3c] sm:$0xf]
    %v104 = vunpack.c.l.b16 %v72
    %v105 = vunpack.c.l.b16 %v73
    %v106 = vunpack.c.l.b16 %v74
    %v107 = vunpack.c.l.b16 %v75
    %v108 = vunpack.c.l.b16 %v76
    %v109 = vunpack.c.l.b16 %v77
    %v110 = vunpack.c.l.b16 %v78
    %v111 = vunpack.c.l.b16 %v79
    %v112 = vunpack.c.l.b16 %v80
    %v113 = vunpack.c.l.b16 %v81
    %v114 = vunpack.c.l.b16 %v82
    %v115 = vunpack.c.l.b16 %v83
    %v116 = vunpack.c.l.b16 %v84
    %v117 = vunpack.c.l.b16 %v85
    %v118 = vunpack.c.l.b16 %v86
    %v119 = vunpack.c.l.b16 %v87
    %v120 = vpack.c.b16 %v105, %v104
    %v121 = vpack.c.b16 %v107, %v106
    %v122 = vpack.c.b16 %v109, %v108
    %v123 = vpack.c.b16 %v111, %v110
    %v124 = vpack.c.b16 %v113, %v112
    %v125 = vpack.c.b16 %v115, %v114
    %v126 = vpack.c.b16 %v117, %v116
    %v127 = vpack.c.b16 %v119, %v118
    %136 = vmatpush.bf16.msra.mxu0 %v127
    %137 = vmatpush.bf16.msra.mxu0 %v126
    %138 = vmatpush.bf16.msra.mxu0 %v125
    %139 = vmatpush.bf16.msra.mxu0 %v124
    %140 = vmatpush.bf16.msra.mxu0 %v123
    %141 = vmatpush.bf16.msra.mxu0 %v122
    %142 = vmatpush.bf16.msra.mxu0 %v121
    %143 = vmatpush.bf16.msra.mxu0 %v120
    %144 = vmatmul.bf16.gmra.mxu0 %v68
    %v145 = vpop.f32.mrf.mxu0
    %v146 = vadd.f32 %v67, %v145
    %v147 = vpop.f32.mrf.mxu0
    %v148 = vadd.f32 %v67, %v147
    %149 = vmatmul.bf16.gmra.mxu0 %v69
    %v150 = vpop.f32.mrf.mxu0
    %v151 = vadd.f32 %v67, %v150
    %v152 = vpop.f32.mrf.mxu0
    %v153 = vadd.f32 %v67, %v152
    %154 = vmatmul.bf16.gmra.mxu0 %v70
    %v155 = vpop.f32.mrf.mxu0
    %v156 = vadd.f32 %v67, %v155
    %v157 = vpop.f32.mrf.mxu0
    %v158 = vadd.f32 %v67, %v157
    %159 = vmatmul.bf16.gmra.mxu0 %v71
    %v160 = vpop.f32.mrf.mxu0
    %v161 = vadd.f32 %v67, %v160
    %v162 = vpop.f32.mrf.mxu0
    %v163 = vadd.f32 %v67, %v162
    %164 = vdwg.mxu0
    %vm165 = vcmp.ge.f32.partialorder %v146, 0.0
    %vm166 = vcmp.ge.f32.partialorder %v148, 0.0
    %vm167 = vcmp.ge.f32.partialorder %v151, 0.0
    %vm168 = vcmp.ge.f32.partialorder %v153, 0.0
    %vm169 = vcmp.ge.f32.partialorder %v156, 0.0
    %vm170 = vcmp.ge.f32.partialorder %v158, 0.0
    %vm171 = vcmp.ge.f32.partialorder %v161, 0.0
    %vm172 = vcmp.ge.f32.partialorder %v163, 0.0
    %v173 = vmul.f32 %v146, 0.2
    %v174 = vmul.f32 %v148, 0.2
    %v175 = vmul.f32 %v151, 0.2
    %v176 = vmul.f32 %v153, 0.2
    %v177 = vmul.f32 %v156, 0.2
    %v178 = vmul.f32 %v158, 0.2
    %v179 = vmul.f32 %v161, 0.2
    %v180 = vmul.f32 %v163, 0.2
    %v181 = vsel %vm165, %v146, %v173
    %v182 = vsel %vm166, %v148, %v174
    %v183 = vsel %vm167, %v151, %v175
    %v184 = vsel %vm168, %v153, %v176
    %v185 = vsel %vm169, %v156, %v177
    %v186 = vsel %vm170, %v158, %v178
    %v187 = vsel %vm171, %v161, %v179
    %v188 = vsel %vm172, %v163, %v180
    %v189 = vld [vmem:[%s5 + $0x1] ss:$0 sm:$0xff]
    %v190 = vpack.c.bf16 %v182, %v181
    %v191 = vpack.c.bf16 %v184, %v183
    %v192 = vpack.c.bf16 %v186, %v185
    %v193 = vpack.c.bf16 %v188, %v187
    %v194 = vld [vmem:[%s2] sm:$0xf]
    %v195 = vld [vmem:[%s2 + $0x4] sm:$0xf]
    %v196 = vld [vmem:[%s2 + $0x8] sm:$0xf]
    %v197 = vld [vmem:[%s2 + $0xc] sm:$0xf]
    %v202 = vunpack.c.l.b16 %v194
    %v203 = vunpack.c.l.b16 %v195
    %v204 = vunpack.c.l.b16 %v196
    %v205 = vunpack.c.l.b16 %v197
    %v206 = vpack.c.b16 %v203, %v202
    %v207 = vpack.c.b16 %v205, %v204
    %vm210 = vcmask 261120
    %v212 = vsel %vm210, %v190, 0
    %v215 = vsel %vm210, %v191, 0
    %v218 = vsel %vm210, %v192, 0
    %v221 = vsel %vm210, %v193, 0
    %223 = vmatpush.bf16.msra.mxu0 0
    %224 = vmatpush.bf16.msra.mxu0 0
    %225 = vmatpush.bf16.msra.mxu0 0
    %226 = vmatpush.bf16.msra.mxu0 0
    %227 = vmatpush.bf16.msra.mxu0 0
    %228 = vmatpush.bf16.msra.mxu0 0
    %229 = vmatpush.bf16.msra.mxu0 %v207
    %230 = vmatpush.bf16.msra.mxu0 %v206
    %231 = vmatmul.bf16.gmra.mxu0 %v212
    %v232 = vpop.f32.mrf.mxu0
    %v233 = vadd.f32 %v189, %v232
    %v234 = vpop.f32.mrf.mxu0
    %v235 = vadd.f32 %v189, %v234
    %236 = vmatmul.bf16.gmra.mxu0 %v215
    %v237 = vpop.f32.mrf.mxu0
    %v238 = vadd.f32 %v189, %v237
    %v239 = vpop.f32.mrf.mxu0
    %v240 = vadd.f32 %v189, %v239
    %241 = vmatmul.bf16.gmra.mxu0 %v218
    %v242 = vpop.f32.mrf.mxu0
    %v243 = vadd.f32 %v189, %v242
    %v244 = vpop.f32.mrf.mxu0
    %v245 = vadd.f32 %v189, %v244
    %246 = vmatmul.bf16.gmra.mxu0 %v221
    %v247 = vpop.f32.mrf.mxu0
    %v248 = vadd.f32 %v189, %v247
    %v249 = vpop.f32.mrf.mxu0
    %v250 = vadd.f32 %v189, %v249
    %251 = vdwg.mxu0
    %v252 = vld [vmem:[%s5 + $0x2] ss:$0 sm:$0xff]
    %v253 = vld [vmem:[%s5 + $0x3] ss:$0 sm:$0xff]
    %vm254 = vcmask 523264
    %v255 = vsel %vm254, %v233, 0.0
    %v256 = vsel %vm254, %v235, 0.0
    %v257 = vadd.f32 %v255, %v256
    %v258 = vsel %vm254, %v238, 0.0
    %v259 = vadd.f32 %v257, %v258
    %v260 = vsel %vm254, %v240, 0.0
    %v261 = vadd.f32 %v259, %v260
    %v262 = vsel %vm254, %v243, 0.0
    %v263 = vadd.f32 %v261, %v262
    %v264 = vsel %vm254, %v245, 0.0
    %v265 = vadd.f32 %v263, %v264
    %v266 = vsel %vm254, %v248, 0.0
    %v267 = vadd.f32 %v265, %v266
    %v268 = vsel %vm254, %v250, 0.0
    %v269 = vadd.f32 %v267, %v268
    %v270 = vrot.slane %v269, 4
    %v271 = vadd.f32 %v269, %v270
    %v272 = vrot.slane %v271, 2
    %v273 = vadd.f32 %v271, %v272
    %v274 = vrot.slane %v273, 1
    %v275 = vadd.f32 %v273, %v274
    %v276 = vrcp.pop 64.0
    %v277 = vmul.f32 64.0, %v276
    %v278 = vsub.f32 1.0, %v277
    %v279 = vmul.f32 %v276, %v278
    %v280 = vadd.f32 %v276, %v279
    %vm281 = vweird.f32 %v276
    %v282 = vsel %vm281, %v276, %v280
    %v283 = vmul.f32 %v275, %v282
    %v284 = vmul.f32 %v233, %v233
    %v285 = vmul.f32 %v235, %v235
    %v286 = vmul.f32 %v238, %v238
    %v287 = vmul.f32 %v240, %v240
    %v288 = vmul.f32 %v243, %v243
    %v289 = vmul.f32 %v245, %v245
    %v290 = vmul.f32 %v248, %v248
    %v291 = vmul.f32 %v250, %v250
    %v292 = vsel %vm254, %v284, 0.0
    %v293 = vsel %vm254, %v285, 0.0
    %v294 = vadd.f32 %v292, %v293
    %v295 = vsel %vm254, %v286, 0.0
    %v296 = vadd.f32 %v294, %v295
    %v297 = vsel %vm254, %v287, 0.0
    %v298 = vadd.f32 %v296, %v297
    %v299 = vsel %vm254, %v288, 0.0
    %v300 = vadd.f32 %v298, %v299
    %v301 = vsel %vm254, %v289, 0.0
    %v302 = vadd.f32 %v300, %v301
    %v303 = vsel %vm254, %v290, 0.0
    %v304 = vadd.f32 %v302, %v303
    %v305 = vsel %vm254, %v291, 0.0
    %v306 = vadd.f32 %v304, %v305
    %v307 = vrot.slane %v306, 4
    %v308 = vadd.f32 %v306, %v307
    %v309 = vrot.slane %v308, 2
    %v310 = vadd.f32 %v308, %v309
    %v311 = vrot.slane %v310, 1
    %v312 = vadd.f32 %v310, %v311
    %v313 = vmul.f32 %v312, %v282
    %v314 = vmul.f32 %v283, %v283
    %v315 = vsub.f32 %v313, %v314
    %v316 = vadd.f32 %v315, 0.8
    %v317 = vrsqrt.pop %v316
    %v318 = vmul.f32 %v317, %v316
    %v319 = vmul.f32 %v318, %v317
    %v320 = vmul.f32 0.5, %v319
    %v321 = vsub.f32 1.5, %v320
    %v322 = vmul.f32 %v317, %v321
    %vm323 = vweird.f32 %v316
    %vm324 = vweird.f32 %v317
    %vm325 = vmor %vm323, %vm324
    %v326 = vsel %vm325, %v317, %v322
    %v327 = vmul.f32 %v326, %v252
    %v328 = vmul.f32 %v283, %v327
    %v329 = vsub.f32 %v253, %v328
    %v330 = vmul.f32 %v233, %v327
    %v331 = vmul.f32 %v235, %v327
    %v332 = vmul.f32 %v238, %v327
    %v333 = vmul.f32 %v240, %v327
    %v334 = vmul.f32 %v243, %v327
    %v335 = vmul.f32 %v245, %v327
    %v336 = vmul.f32 %v248, %v327
    %v337 = vmul.f32 %v250, %v327
    %v338 = vadd.f32 %v330, %v329
    %v339 = vadd.f32 %v331, %v329
    %v340 = vadd.f32 %v332, %v329
    %v341 = vadd.f32 %v333, %v329
    %v342 = vadd.f32 %v334, %v329
    %v343 = vadd.f32 %v335, %v329
    %v344 = vadd.f32 %v336, %v329
    %v345 = vadd.f32 %v337, %v329
    %vm346 = vcmp.ge.f32.partialorder %v338, 0.0
    %vm347 = vcmp.ge.f32.partialorder %v339, 0.0
    %vm348 = vcmp.ge.f32.partialorder %v340, 0.0
    %vm349 = vcmp.ge.f32.partialorder %v341, 0.0
    %vm350 = vcmp.ge.f32.partialorder %v342, 0.0
    %vm351 = vcmp.ge.f32.partialorder %v343, 0.0
    %vm352 = vcmp.ge.f32.partialorder %v344, 0.0
    %vm353 = vcmp.ge.f32.partialorder %v345, 0.0
    %v354 = vmul.f32 %v338, 0.2
    %v355 = vmul.f32 %v339, 0.2
    %v356 = vmul.f32 %v340, 0.2
    %v357 = vmul.f32 %v341, 0.2
    %v358 = vmul.f32 %v342, 0.2
    %v359 = vmul.f32 %v343, 0.2
    %v360 = vmul.f32 %v344, 0.2
    %v361 = vmul.f32 %v345, 0.2
    %v362 = vsel %vm346, %v338, %v354
    %v363 = vsel %vm347, %v339, %v355
    %v364 = vsel %vm348, %v340, %v356
    %v365 = vsel %vm349, %v341, %v357
    %v366 = vsel %vm350, %v342, %v358
    %v367 = vsel %vm351, %v343, %v359
    %v368 = vsel %vm352, %v344, %v360
    %v369 = vsel %vm353, %v345, %v361
    %v370 = vld [vmem:[%s5 + $0x4] ss:$0 sm:$0xff]
    %v371 = vpack.c.bf16 %v363, %v362
    %v372 = vpack.c.bf16 %v365, %v364
    %v373 = vpack.c.bf16 %v367, %v366
    %v374 = vpack.c.bf16 %v369, %v368
    %v375 = vld [vmem:[#allocation2] sm:$0xf]
    %v376 = vld [vmem:[#allocation2 + $0x4] sm:$0xf]
    %v377 = vld [vmem:[#allocation2 + $0x8] sm:$0xf]
    %v378 = vld [vmem:[#allocation2 + $0xc] sm:$0xf]
    %v379 = vld [vmem:[#allocation2 + $0x10] sm:$0xf]
    %v380 = vld [vmem:[#allocation2 + $0x14] sm:$0xf]
    %v381 = vld [vmem:[#allocation2 + $0x18] sm:$0xf]
    %v382 = vld [vmem:[#allocation2 + $0x1c] sm:$0xf]
    %v391 = vunpack.c.l.b16 %v375
    %v392 = vunpack.c.l.b16 %v376
    %v393 = vunpack.c.l.b16 %v377
    %v394 = vunpack.c.l.b16 %v378
    %v395 = vunpack.c.l.b16 %v379
    %v396 = vunpack.c.l.b16 %v380
    %v397 = vunpack.c.l.b16 %v381
    %v398 = vunpack.c.l.b16 %v382
    %v399 = vpack.c.b16 %v392, %v391
    %v400 = vpack.c.b16 %v394, %v393
    %v401 = vpack.c.b16 %v396, %v395
    %v402 = vpack.c.b16 %v398, %v397
    %v408 = vsel %vm254, %v371, 0
    %v411 = vsel %vm254, %v372, 0
    %v414 = vsel %vm254, %v373, 0
    %v417 = vsel %vm254, %v374, 0
    %419 = vmatpush.bf16.msra.mxu0 0
    %420 = vmatpush.bf16.msra.mxu0 0
    %421 = vmatpush.bf16.msra.mxu0 0
    %422 = vmatpush.bf16.msra.mxu0 0
    %423 = vmatpush.bf16.msra.mxu0 %v402
    %424 = vmatpush.bf16.msra.mxu0 %v401
    %425 = vmatpush.bf16.msra.mxu0 %v400
    %426 = vmatpush.bf16.msra.mxu0 %v399
    %427 = vmatmul.bf16.gmra.mxu0 %v408
    %v428 = vpop.f32.mrf.mxu0
    %v429 = vadd.f32 %v370, %v428
    %v430 = vpop.f32.mrf.mxu0
    %v431 = vadd.f32 %v370, %v430
    %432 = vmatmul.bf16.gmra.mxu0 %v411
    %v433 = vpop.f32.mrf.mxu0
    %v434 = vadd.f32 %v370, %v433
    %v435 = vpop.f32.mrf.mxu0
    %v436 = vadd.f32 %v370, %v435
    %437 = vmatmul.bf16.gmra.mxu0 %v414
    %v438 = vpop.f32.mrf.mxu0
    %v439 = vadd.f32 %v370, %v438
    %v440 = vpop.f32.mrf.mxu0
    %v441 = vadd.f32 %v370, %v440
    %442 = vmatmul.bf16.gmra.mxu0 %v417
    %v443 = vpop.f32.mrf.mxu0
    %v444 = vadd.f32 %v370, %v443
    %v445 = vpop.f32.mrf.mxu0
    %v446 = vadd.f32 %v370, %v445
    %447 = vdwg.mxu0
    %v448 = vld [vmem:[%s5 + $0x5] ss:$0 sm:$0xff]
    %v449 = vld [vmem:[%s5 + $0x6] ss:$0 sm:$0xff]
    %v450 = vadd.f32 %v429, %v431
    %v451 = vadd.f32 %v450, %v434
    %v452 = vadd.f32 %v451, %v436
    %v453 = vadd.f32 %v452, %v439
    %v454 = vadd.f32 %v453, %v441
    %v455 = vadd.f32 %v454, %v444
    %v456 = vadd.f32 %v455, %v446
    %v457 = vrot.slane %v456, 4
    %v458 = vadd.f32 %v456, %v457
    %v459 = vrot.slane %v458, 2
    %v460 = vadd.f32 %v458, %v459
    %v461 = vrot.slane %v460, 1
    %v462 = vadd.f32 %v460, %v461
    %v463 = vmul.f32 %v462, %v282
    %v464 = vmul.f32 %v429, %v429
    %v465 = vmul.f32 %v431, %v431
    %v466 = vmul.f32 %v434, %v434
    %v467 = vmul.f32 %v436, %v436
    %v468 = vmul.f32 %v439, %v439
    %v469 = vmul.f32 %v441, %v441
    %v470 = vmul.f32 %v444, %v444
    %v471 = vmul.f32 %v446, %v446
    %v472 = vadd.f32 %v464, %v465
    %v473 = vadd.f32 %v472, %v466
    %v474 = vadd.f32 %v473, %v467
    %v475 = vadd.f32 %v474, %v468
    %v476 = vadd.f32 %v475, %v469
    %v477 = vadd.f32 %v476, %v470
    %v478 = vadd.f32 %v477, %v471
    %v479 = vrot.slane %v478, 4
    %v480 = vadd.f32 %v478, %v479
    %v481 = vrot.slane %v480, 2
    %v482 = vadd.f32 %v480, %v481
    %v483 = vrot.slane %v482, 1
    %v484 = vadd.f32 %v482, %v483
    %v485 = vmul.f32 %v484, %v282
    %v486 = vmul.f32 %v463, %v463
    %v487 = vsub.f32 %v485, %v486
    %v488 = vadd.f32 %v487, 0.8
    %v489 = vrsqrt.pop %v488
    %v490 = vmul.f32 %v489, %v488
    %v491 = vmul.f32 %v490, %v489
    %v492 = vmul.f32 0.5, %v491
    %v493 = vsub.f32 1.5, %v492
    %v494 = vmul.f32 %v489, %v493
    %vm495 = vweird.f32 %v488
    %vm496 = vweird.f32 %v489
    %vm497 = vmor %vm495, %vm496
    %v498 = vsel %vm497, %v489, %v494
    %v499 = vmul.f32 %v498, %v448
    %v500 = vmul.f32 %v463, %v499
    %v501 = vsub.f32 %v449, %v500
    %v502 = vmul.f32 %v429, %v499
    %v503 = vmul.f32 %v431, %v499
    %v504 = vmul.f32 %v434, %v499
    %v505 = vmul.f32 %v436, %v499
    %v506 = vmul.f32 %v439, %v499
    %v507 = vmul.f32 %v441, %v499
    %v508 = vmul.f32 %v444, %v499
    %v509 = vmul.f32 %v446, %v499
    %v510 = vadd.f32 %v502, %v501
    %v511 = vadd.f32 %v503, %v501
    %v512 = vadd.f32 %v504, %v501
    %v513 = vadd.f32 %v505, %v501
    %v514 = vadd.f32 %v506, %v501
    %v515 = vadd.f32 %v507, %v501
    %v516 = vadd.f32 %v508, %v501
    %v517 = vadd.f32 %v509, %v501
    %vm518 = vcmp.ge.f32.partialorder %v510, 0.0
    %vm519 = vcmp.ge.f32.partialorder %v511, 0.0
    %vm520 = vcmp.ge.f32.partialorder %v512, 0.0
    %vm521 = vcmp.ge.f32.partialorder %v513, 0.0
    %vm522 = vcmp.ge.f32.partialorder %v514, 0.0
    %vm523 = vcmp.ge.f32.partialorder %v515, 0.0
    %vm524 = vcmp.ge.f32.partialorder %v516, 0.0
    %vm525 = vcmp.ge.f32.partialorder %v517, 0.0
    %v526 = vmul.f32 %v510, 0.2
    %v527 = vmul.f32 %v511, 0.2
    %v528 = vmul.f32 %v512, 0.2
    %v529 = vmul.f32 %v513, 0.2
    %v530 = vmul.f32 %v514, 0.2
    %v531 = vmul.f32 %v515, 0.2
    %v532 = vmul.f32 %v516, 0.2
    %v533 = vmul.f32 %v517, 0.2
    %v534 = vsel %vm518, %v510, %v526
    %v535 = vsel %vm519, %v511, %v527
    %v536 = vsel %vm520, %v512, %v528
    %v537 = vsel %vm521, %v513, %v529
    %v538 = vsel %vm522, %v514, %v530
    %v539 = vsel %vm523, %v515, %v531
    %v540 = vsel %vm524, %v516, %v532
    %v541 = vsel %vm525, %v517, %v533
    %s542 = scalar_lea.vmem %s5, 7
    %v543 = vld [vmem:[%s542] ss:$8 sm:$0x3]
    %v544 = vpack.c.bf16 %v535, %v534
    %v545 = vpack.c.bf16 %v537, %v536
    %v546 = vpack.c.bf16 %v539, %v538
    %v547 = vpack.c.bf16 %v541, %v540
    %v548 = vld [vmem:[%s4] sm:$0xff]
    %v549 = vld [vmem:[%s4 + $0x8] sm:$0xff]
    %v550 = vld [vmem:[%s4 + $0x10] sm:$0xff]
    %v551 = vld [vmem:[%s4 + $0x18] sm:$0xff]
    %v552 = vld [vmem:[%s4 + $0x20] sm:$0xff]
    %v553 = vld [vmem:[%s4 + $0x28] sm:$0xff]
    %v554 = vld [vmem:[%s4 + $0x30] sm:$0xff]
    %v555 = vld [vmem:[%s4 + $0x38] sm:$0xff]
    %v556 = vld [vmem:[%s4 + $0x40] sm:$0xff]
    %v557 = vld [vmem:[%s4 + $0x48] sm:$0xff]
    %v558 = vld [vmem:[%s4 + $0x50] sm:$0xff]
    %v559 = vld [vmem:[%s4 + $0x58] sm:$0xff]
    %v560 = vld [vmem:[%s4 + $0x60] sm:$0xff]
    %v561 = vld [vmem:[%s4 + $0x68] sm:$0xff]
    %v562 = vld [vmem:[%s4 + $0x70] sm:$0xff]
    %v563 = vld [vmem:[%s4 + $0x78] sm:$0xff]
    %v565 = vperm.slane %v543, 0
    %v566 = vperm.slane %v543, 1
    %v585 = vunpack.c.l.b16 %v548
    %v586 = vunpack.c.h.b16 %v548
    %v587 = vunpack.c.l.b16 %v549
    %v588 = vunpack.c.h.b16 %v549
    %v589 = vunpack.c.l.b16 %v550
    %v590 = vunpack.c.h.b16 %v550
    %v591 = vunpack.c.l.b16 %v551
    %v592 = vunpack.c.h.b16 %v551
    %v593 = vunpack.c.l.b16 %v552
    %v594 = vunpack.c.h.b16 %v552
    %v595 = vunpack.c.l.b16 %v553
    %v596 = vunpack.c.h.b16 %v553
    %v597 = vunpack.c.l.b16 %v554
    %v598 = vunpack.c.h.b16 %v554
    %v599 = vunpack.c.l.b16 %v555
    %v600 = vunpack.c.h.b16 %v555
    %v601 = vunpack.c.l.b16 %v556
    %v602 = vunpack.c.h.b16 %v556
    %v603 = vunpack.c.l.b16 %v557
    %v604 = vunpack.c.h.b16 %v557
    %v605 = vunpack.c.l.b16 %v558
    %v606 = vunpack.c.h.b16 %v558
    %v607 = vunpack.c.l.b16 %v559
    %v608 = vunpack.c.h.b16 %v559
    %v609 = vunpack.c.l.b16 %v560
    %v610 = vunpack.c.h.b16 %v560
    %v611 = vunpack.c.l.b16 %v561
    %v612 = vunpack.c.h.b16 %v561
    %v613 = vunpack.c.l.b16 %v562
    %v614 = vunpack.c.h.b16 %v562
    %v615 = vunpack.c.l.b16 %v563
    %v616 = vunpack.c.h.b16 %v563
    %v617 = vpack.c.b16 %v587, %v585
    %v618 = vpack.c.b16 %v588, %v586
    %v619 = vpack.c.b16 %v591, %v589
    %v620 = vpack.c.b16 %v592, %v590
    %v621 = vpack.c.b16 %v595, %v593
    %v622 = vpack.c.b16 %v596, %v594
    %v623 = vpack.c.b16 %v599, %v597
    %v624 = vpack.c.b16 %v600, %v598
    %v625 = vpack.c.b16 %v603, %v601
    %v626 = vpack.c.b16 %v604, %v602
    %v627 = vpack.c.b16 %v607, %v605
    %v628 = vpack.c.b16 %v608, %v606
    %v629 = vpack.c.b16 %v611, %v609
    %v630 = vpack.c.b16 %v612, %v610
    %v631 = vpack.c.b16 %v615, %v613
    %v632 = vpack.c.b16 %v616, %v614
    %649 = vmatpush.bf16.msra.mxu0 %v631
    %650 = vmatpush.bf16.msra.mxu0 %v629
    %651 = vmatpush.bf16.msra.mxu0 %v627
    %652 = vmatpush.bf16.msra.mxu0 %v625
    %653 = vmatpush.bf16.msra.mxu0 %v623
    %654 = vmatpush.bf16.msra.mxu0 %v621
    %655 = vmatpush.bf16.msra.mxu0 %v619
    %656 = vmatpush.bf16.msra.mxu0 %v617
    %657 = vmatmul.bf16.gmra.mxu0 %v544
    %v658 = vpop.f32.mrf.mxu0
    %v659 = vadd.f32 %v565, %v658
    %v660 = vpop.f32.mrf.mxu0
    %v661 = vadd.f32 %v565, %v660
    %662 = vmatmul.bf16.gmra.mxu0 %v545
    %v663 = vpop.f32.mrf.mxu0
    %v664 = vadd.f32 %v565, %v663
    %v665 = vpop.f32.mrf.mxu0
    %v666 = vadd.f32 %v565, %v665
    %667 = vmatmul.bf16.gmra.mxu0 %v546
    %v668 = vpop.f32.mrf.mxu0
    %v669 = vadd.f32 %v565, %v668
    %v670 = vpop.f32.mrf.mxu0
    %v671 = vadd.f32 %v565, %v670
    %672 = vmatmul.bf16.gmra.mxu0 %v547
    %v673 = vpop.f32.mrf.mxu0
    %v674 = vadd.f32 %v565, %v673
    %v675 = vpop.f32.mrf.mxu0
    %v676 = vadd.f32 %v565, %v675
    %677 = vdwg.mxu0
    %678 = vmatpush.bf16.msra.mxu0 %v632
    %679 = vmatpush.bf16.msra.mxu0 %v630
    %680 = vmatpush.bf16.msra.mxu0 %v628
    %681 = vmatpush.bf16.msra.mxu0 %v626
    %682 = vmatpush.bf16.msra.mxu0 %v624
    %683 = vmatpush.bf16.msra.mxu0 %v622
    %684 = vmatpush.bf16.msra.mxu0 %v620
    %685 = vmatpush.bf16.msra.mxu0 %v618
    %686 = vmatmul.bf16.gmra.mxu0 %v544
    %v687 = vpop.f32.mrf.mxu0
    %v688 = vadd.f32 %v566, %v687
    %v689 = vpop.f32.mrf.mxu0
    %v690 = vadd.f32 %v566, %v689
    %691 = vmatmul.bf16.gmra.mxu0 %v545
    %v692 = vpop.f32.mrf.mxu0
    %v693 = vadd.f32 %v566, %v692
    %v694 = vpop.f32.mrf.mxu0
    %v695 = vadd.f32 %v566, %v694
    %696 = vmatmul.bf16.gmra.mxu0 %v546
    %v697 = vpop.f32.mrf.mxu0
    %v698 = vadd.f32 %v566, %v697
    %v699 = vpop.f32.mrf.mxu0
    %v700 = vadd.f32 %v566, %v699
    %701 = vmatmul.bf16.gmra.mxu0 %v547
    %v702 = vpop.f32.mrf.mxu0
    %v703 = vadd.f32 %v566, %v702
    %v704 = vpop.f32.mrf.mxu0
    %v705 = vadd.f32 %v566, %v704
    %706 = vdwg.mxu0
    %s707 = scalar_lea.vmem %s5, 32
    %v708 = vld [vmem:[%s707] ss:$8 sm:$0x3]
    %s709 = scalar_lea.vmem %s5, 33
    %v710 = vld [vmem:[%s709] ss:$8 sm:$0x3]
    %v711 = vadd.f32 %v659, %v661
    %v712 = vadd.f32 %v711, %v664
    %v713 = vadd.f32 %v712, %v666
    %v714 = vadd.f32 %v713, %v669
    %v715 = vadd.f32 %v714, %v671
    %v716 = vadd.f32 %v715, %v674
    %v717 = vadd.f32 %v716, %v676
    %v718 = vrot.slane %v717, 4
    %v719 = vadd.f32 %v717, %v718
    %v720 = vrot.slane %v719, 2
    %v721 = vadd.f32 %v719, %v720
    %v722 = vrot.slane %v721, 1
    %v723 = vadd.f32 %v721, %v722
    %v724 = vadd.f32 %v688, %v690
    %v725 = vadd.f32 %v724, %v693
    %v726 = vadd.f32 %v725, %v695
    %v727 = vadd.f32 %v726, %v698
    %v728 = vadd.f32 %v727, %v700
    %v729 = vadd.f32 %v728, %v703
    %v730 = vadd.f32 %v729, %v705
    %v731 = vrot.slane %v730, 4
    %v732 = vadd.f32 %v730, %v731
    %v733 = vrot.slane %v732, 2
    %v734 = vadd.f32 %v732, %v733
    %v735 = vrot.slane %v734, 1
    %v736 = vadd.f32 %v734, %v735
    %v737 = vmul.f32 %v723, %v282
    %v738 = vmul.f32 %v736, %v282
    %v739 = vmul.f32 %v659, %v659
    %v740 = vmul.f32 %v688, %v688
    %v741 = vmul.f32 %v661, %v661
    %v742 = vmul.f32 %v690, %v690
    %v743 = vmul.f32 %v664, %v664
    %v744 = vmul.f32 %v693, %v693
    %v745 = vmul.f32 %v666, %v666
    %v746 = vmul.f32 %v695, %v695
    %v747 = vmul.f32 %v669, %v669
    %v748 = vmul.f32 %v698, %v698
    %v749 = vmul.f32 %v671, %v671
    %v750 = vmul.f32 %v700, %v700
    %v751 = vmul.f32 %v674, %v674
    %v752 = vmul.f32 %v703, %v703
    %v753 = vmul.f32 %v676, %v676
    %v754 = vmul.f32 %v705, %v705
    %v755 = vadd.f32 %v739, %v741
    %v756 = vadd.f32 %v755, %v743
    %v757 = vadd.f32 %v756, %v745
    %v758 = vadd.f32 %v757, %v747
    %v759 = vadd.f32 %v758, %v749
    %v760 = vadd.f32 %v759, %v751
    %v761 = vadd.f32 %v760, %v753
    %v762 = vrot.slane %v761, 4
    %v763 = vadd.f32 %v761, %v762
    %v764 = vrot.slane %v763, 2
    %v765 = vadd.f32 %v763, %v764
    %v766 = vrot.slane %v765, 1
    %v767 = vadd.f32 %v765, %v766
    %v768 = vadd.f32 %v740, %v742
    %v769 = vadd.f32 %v768, %v744
    %v770 = vadd.f32 %v769, %v746
    %v771 = vadd.f32 %v770, %v748
    %v772 = vadd.f32 %v771, %v750
    %v773 = vadd.f32 %v772, %v752
    %v774 = vadd.f32 %v773, %v754
    %v775 = vrot.slane %v774, 4
    %v776 = vadd.f32 %v774, %v775
    %v777 = vrot.slane %v776, 2
    %v778 = vadd.f32 %v776, %v777
    %v779 = vrot.slane %v778, 1
    %v780 = vadd.f32 %v778, %v779
    %v781 = vmul.f32 %v767, %v282
    %v782 = vmul.f32 %v780, %v282
    %v783 = vmul.f32 %v737, %v737
    %v784 = vmul.f32 %v738, %v738
    %v785 = vsub.f32 %v781, %v783
    %v786 = vsub.f32 %v782, %v784
    %v787 = vadd.f32 %v785, 0.8
    %v788 = vadd.f32 %v786, 0.8
    %v789 = vrsqrt.pop %v787
    %v790 = vmul.f32 %v789, %v787
    %v791 = vmul.f32 %v790, %v789
    %v792 = vmul.f32 0.5, %v791
    %v793 = vsub.f32 1.5, %v792
    %v794 = vmul.f32 %v789, %v793
    %vm795 = vweird.f32 %v787
    %vm796 = vweird.f32 %v789
    %vm797 = vmor %vm795, %vm796
    %v798 = vsel %vm797, %v789, %v794
    %v799 = vrsqrt.pop %v788
    %v800 = vmul.f32 %v799, %v788
    %v801 = vmul.f32 %v800, %v799
    %v802 = vmul.f32 0.5, %v801
    %v803 = vsub.f32 1.5, %v802
    %v804 = vmul.f32 %v799, %v803
    %vm805 = vweird.f32 %v788
    %vm806 = vweird.f32 %v799
    %vm807 = vmor %vm805, %vm806
    %v808 = vsel %vm807, %v799, %v804
    %v810 = vperm.slane %v708, 0
    %v811 = vperm.slane %v708, 1
    %v814 = vmul.f32 %v798, %v810
    %v815 = vmul.f32 %v808, %v811
    %v816 = vmul.f32 %v737, %v814
    %v817 = vmul.f32 %v738, %v815
    %v820 = vrot.slane %v817, 7
    %vm821 = vcmask 1040384
    %v822 = vsel %vm821, %v816, %v820
    %v824 = vsub.f32 %v710, %v822
    %v825 = vperm.slane %v814, 0
    %v826 = vperm.slane %v815, 0
    %v827 = vmul.f32 %v659, %v825
    %v828 = vmul.f32 %v688, %v826
    %v829 = vmul.f32 %v661, %v825
    %v830 = vmul.f32 %v690, %v826
    %v831 = vmul.f32 %v664, %v825
    %v832 = vmul.f32 %v693, %v826
    %v833 = vmul.f32 %v666, %v825
    %v834 = vmul.f32 %v695, %v826
    %v835 = vmul.f32 %v669, %v825
    %v836 = vmul.f32 %v698, %v826
    %v837 = vmul.f32 %v671, %v825
    %v838 = vmul.f32 %v700, %v826
    %v839 = vmul.f32 %v674, %v825
    %v840 = vmul.f32 %v703, %v826
    %v841 = vmul.f32 %v676, %v825
    %v842 = vmul.f32 %v705, %v826
    %v844 = vperm.slane %v824, 0
    %v845 = vperm.slane %v824, 1
    %v848 = vadd.f32 %v827, %v844
    %v849 = vadd.f32 %v828, %v845
    %v850 = vadd.f32 %v829, %v844
    %v851 = vadd.f32 %v830, %v845
    %v852 = vadd.f32 %v831, %v844
    %v853 = vadd.f32 %v832, %v845
    %v854 = vadd.f32 %v833, %v844
    %v855 = vadd.f32 %v834, %v845
    %v856 = vadd.f32 %v835, %v844
    %v857 = vadd.f32 %v836, %v845
    %v858 = vadd.f32 %v837, %v844
    %v859 = vadd.f32 %v838, %v845
    %v860 = vadd.f32 %v839, %v844
    %v861 = vadd.f32 %v840, %v845
    %v862 = vadd.f32 %v841, %v844
    %v863 = vadd.f32 %v842, %v845
    %vm864 = vcmp.ge.f32.partialorder %v848, 0.0
    %vm865 = vcmp.ge.f32.partialorder %v849, 0.0
    %vm866 = vcmp.ge.f32.partialorder %v850, 0.0
    %vm867 = vcmp.ge.f32.partialorder %v851, 0.0
    %vm868 = vcmp.ge.f32.partialorder %v852, 0.0
    %vm869 = vcmp.ge.f32.partialorder %v853, 0.0
    %vm870 = vcmp.ge.f32.partialorder %v854, 0.0
    %vm871 = vcmp.ge.f32.partialorder %v855, 0.0
    %vm872 = vcmp.ge.f32.partialorder %v856, 0.0
    %vm873 = vcmp.ge.f32.partialorder %v857, 0.0
    %vm874 = vcmp.ge.f32.partialorder %v858, 0.0
    %vm875 = vcmp.ge.f32.partialorder %v859, 0.0
    %vm876 = vcmp.ge.f32.partialorder %v860, 0.0
    %vm877 = vcmp.ge.f32.partialorder %v861, 0.0
    %vm878 = vcmp.ge.f32.partialorder %v862, 0.0
    %vm879 = vcmp.ge.f32.partialorder %v863, 0.0
    %v880 = vmul.f32 %v848, 0.2
    %v881 = vmul.f32 %v849, 0.2
    %v882 = vmul.f32 %v850, 0.2
    %v883 = vmul.f32 %v851, 0.2
    %v884 = vmul.f32 %v852, 0.2
    %v885 = vmul.f32 %v853, 0.2
    %v886 = vmul.f32 %v854, 0.2
    %v887 = vmul.f32 %v855, 0.2
    %v888 = vmul.f32 %v856, 0.2
    %v889 = vmul.f32 %v857, 0.2
    %v890 = vmul.f32 %v858, 0.2
    %v891 = vmul.f32 %v859, 0.2
    %v892 = vmul.f32 %v860, 0.2
    %v893 = vmul.f32 %v861, 0.2
    %v894 = vmul.f32 %v862, 0.2
    %v895 = vmul.f32 %v863, 0.2
    %v896 = vsel %vm864, %v848, %v880
    %v897 = vsel %vm865, %v849, %v881
    %v898 = vsel %vm866, %v850, %v882
    %v899 = vsel %vm867, %v851, %v883
    %v900 = vsel %vm868, %v852, %v884
    %v901 = vsel %vm869, %v853, %v885
    %v902 = vsel %vm870, %v854, %v886
    %v903 = vsel %vm871, %v855, %v887
    %v904 = vsel %vm872, %v856, %v888
    %v905 = vsel %vm873, %v857, %v889
    %v906 = vsel %vm874, %v858, %v890
    %v907 = vsel %vm875, %v859, %v891
    %v908 = vsel %vm876, %v860, %v892
    %v909 = vsel %vm877, %v861, %v893
    %v910 = vsel %vm878, %v862, %v894
    %v911 = vsel %vm879, %v863, %v895
    %v912 = vpack.c.bf16 %v898, %v896
    %v913 = vpack.c.bf16 %v899, %v897
    %v914 = vpack.c.bf16 %v902, %v900
    %v915 = vpack.c.bf16 %v903, %v901
    %v916 = vpack.c.bf16 %v906, %v904
    %v917 = vpack.c.bf16 %v907, %v905
    %v918 = vpack.c.bf16 %v910, %v908
    %v919 = vpack.c.bf16 %v911, %v909
    %v920 = vld [vmem:[#allocation4] sm:$0xff]
    %v921 = vld [vmem:[#allocation4 + $0x8] sm:$0xff]
    %v922 = vld [vmem:[#allocation4 + $0x10] sm:$0xff]
    %v923 = vld [vmem:[#allocation4 + $0x18] sm:$0xff]
    %v924 = vld [vmem:[#allocation4 + $0x20] sm:$0xff]
    %v925 = vld [vmem:[#allocation4 + $0x28] sm:$0xff]
    %v926 = vld [vmem:[#allocation4 + $0x30] sm:$0xff]
    %v927 = vld [vmem:[#allocation4 + $0x38] sm:$0xff]
    %v928 = vld [vmem:[#allocation4 + $0x40] sm:$0xff]
    %v929 = vld [vmem:[#allocation4 + $0x48] sm:$0xff]
    %v930 = vld [vmem:[#allocation4 + $0x50] sm:$0xff]
    %v931 = vld [vmem:[#allocation4 + $0x58] sm:$0xff]
    %v932 = vld [vmem:[#allocation4 + $0x60] sm:$0xff]
    %v933 = vld [vmem:[#allocation4 + $0x68] sm:$0xff]
    %v934 = vld [vmem:[#allocation4 + $0x70] sm:$0xff]
    %v935 = vld [vmem:[#allocation4 + $0x78] sm:$0xff]
    %v936 = vld [vmem:[#allocation4 + $0x80] sm:$0xff]
    %v937 = vld [vmem:[#allocation4 + $0x88] sm:$0xff]
    %v938 = vld [vmem:[#allocation4 + $0x90] sm:$0xff]
    %v939 = vld [vmem:[#allocation4 + $0x98] sm:$0xff]
    %v940 = vld [vmem:[#allocation4 + $0xa0] sm:$0xff]
    %v941 = vld [vmem:[#allocation4 + $0xa8] sm:$0xff]
    %v942 = vld [vmem:[#allocation4 + $0xb0] sm:$0xff]
    %v943 = vld [vmem:[#allocation4 + $0xb8] sm:$0xff]
    %v944 = vld [vmem:[#allocation4 + $0xc0] sm:$0xff]
    %v945 = vld [vmem:[#allocation4 + $0xc8] sm:$0xff]
    %v946 = vld [vmem:[#allocation4 + $0xd0] sm:$0xff]
    %v947 = vld [vmem:[#allocation4 + $0xd8] sm:$0xff]
    %v948 = vld [vmem:[#allocation4 + $0xe0] sm:$0xff]
    %v949 = vld [vmem:[#allocation4 + $0xe8] sm:$0xff]
    %v950 = vld [vmem:[#allocation4 + $0xf0] sm:$0xff]
    %v951 = vld [vmem:[#allocation4 + $0xf8] sm:$0xff]
    %v952 = vld [vmem:[#allocation4 + $0x100] sm:$0xff]
    %v953 = vld [vmem:[#allocation4 + $0x108] sm:$0xff]
    %v954 = vld [vmem:[#allocation4 + $0x110] sm:$0xff]
    %v955 = vld [vmem:[#allocation4 + $0x118] sm:$0xff]
    %v956 = vld [vmem:[#allocation4 + $0x120] sm:$0xff]
    %v957 = vld [vmem:[#allocation4 + $0x128] sm:$0xff]
    %v958 = vld [vmem:[#allocation4 + $0x130] sm:$0xff]
    %v959 = vld [vmem:[#allocation4 + $0x138] sm:$0xff]
    %v960 = vld [vmem:[#allocation4 + $0x140] sm:$0xff]
    %v961 = vld [vmem:[#allocation4 + $0x148] sm:$0xff]
    %v962 = vld [vmem:[#allocation4 + $0x150] sm:$0xff]
    %v963 = vld [vmem:[#allocation4 + $0x158] sm:$0xff]
    %v964 = vld [vmem:[#allocation4 + $0x160] sm:$0xff]
    %v965 = vld [vmem:[#allocation4 + $0x168] sm:$0xff]
    %v966 = vld [vmem:[#allocation4 + $0x170] sm:$0xff]
    %v967 = vld [vmem:[#allocation4 + $0x178] sm:$0xff]
    %v968 = vld [vmem:[#allocation4 + $0x180] sm:$0xff]
    %v969 = vld [vmem:[#allocation4 + $0x188] sm:$0xff]
    %v970 = vld [vmem:[#allocation4 + $0x190] sm:$0xff]
    %v971 = vld [vmem:[#allocation4 + $0x198] sm:$0xff]
    %v972 = vld [vmem:[#allocation4 + $0x1a0] sm:$0xff]
    %v973 = vld [vmem:[#allocation4 + $0x1a8] sm:$0xff]
    %v974 = vld [vmem:[#allocation4 + $0x1b0] sm:$0xff]
    %v975 = vld [vmem:[#allocation4 + $0x1b8] sm:$0xff]
    %v976 = vld [vmem:[#allocation4 + $0x1c0] sm:$0xff]
    %v977 = vld [vmem:[#allocation4 + $0x1c8] sm:$0xff]
    %v978 = vld [vmem:[#allocation4 + $0x1d0] sm:$0xff]
    %v979 = vld [vmem:[#allocation4 + $0x1d8] sm:$0xff]
    %v980 = vld [vmem:[#allocation4 + $0x1e0] sm:$0xff]
    %v981 = vld [vmem:[#allocation4 + $0x1e8] sm:$0xff]
    %v982 = vld [vmem:[#allocation4 + $0x1f0] sm:$0xff]
    %v983 = vld [vmem:[#allocation4 + $0x1f8] sm:$0xff]
    %s984 = scalar_lea.vmem %s5, 34
    %v985 = vld [vmem:[%s984] ss:$8 sm:$0xf]
    %v987 = vperm.slane %v985, 0
    %v988 = vperm.slane %v985, 1
    %v989 = vperm.slane %v985, 2
    %v990 = vperm.slane %v985, 3
    %v1059 = vunpack.c.l.b16 %v920
    %v1060 = vunpack.c.h.b16 %v920
    %v1061 = vunpack.c.l.b16 %v921
    %v1062 = vunpack.c.h.b16 %v921
    %v1063 = vunpack.c.l.b16 %v922
    %v1064 = vunpack.c.h.b16 %v922
    %v1065 = vunpack.c.l.b16 %v923
    %v1066 = vunpack.c.h.b16 %v923
    %v1067 = vunpack.c.l.b16 %v924
    %v1068 = vunpack.c.h.b16 %v924
    %v1069 = vunpack.c.l.b16 %v925
    %v1070 = vunpack.c.h.b16 %v925
    %v1071 = vunpack.c.l.b16 %v926
    %v1072 = vunpack.c.h.b16 %v926
    %v1073 = vunpack.c.l.b16 %v927
    %v1074 = vunpack.c.h.b16 %v927
    %v1075 = vunpack.c.l.b16 %v928
    %v1076 = vunpack.c.h.b16 %v928
    %v1077 = vunpack.c.l.b16 %v929
    %v1078 = vunpack.c.h.b16 %v929
    %v1079 = vunpack.c.l.b16 %v930
    %v1080 = vunpack.c.h.b16 %v930
    %v1081 = vunpack.c.l.b16 %v931
    %v1082 = vunpack.c.h.b16 %v931
    %v1083 = vunpack.c.l.b16 %v932
    %v1084 = vunpack.c.h.b16 %v932
    %v1085 = vunpack.c.l.b16 %v933
    %v1086 = vunpack.c.h.b16 %v933
    %v1087 = vunpack.c.l.b16 %v934
    %v1088 = vunpack.c.h.b16 %v934
    %v1089 = vunpack.c.l.b16 %v935
    %v1090 = vunpack.c.h.b16 %v935
    %v1091 = vunpack.c.l.b16 %v936
    %v1092 = vunpack.c.h.b16 %v936
    %v1093 = vunpack.c.l.b16 %v937
    %v1094 = vunpack.c.h.b16 %v937
    %v1095 = vunpack.c.l.b16 %v938
    %v1096 = vunpack.c.h.b16 %v938
    %v1097 = vunpack.c.l.b16 %v939
    %v1098 = vunpack.c.h.b16 %v939
    %v1099 = vunpack.c.l.b16 %v940
    %v1100 = vunpack.c.h.b16 %v940
    %v1101 = vunpack.c.l.b16 %v941
    %v1102 = vunpack.c.h.b16 %v941
    %v1103 = vunpack.c.l.b16 %v942
    %v1104 = vunpack.c.h.b16 %v942
    %v1105 = vunpack.c.l.b16 %v943
    %v1106 = vunpack.c.h.b16 %v943
    %v1107 = vunpack.c.l.b16 %v944
    %v1108 = vunpack.c.h.b16 %v944
    %v1109 = vunpack.c.l.b16 %v945
    %v1110 = vunpack.c.h.b16 %v945
    %v1111 = vunpack.c.l.b16 %v946
    %v1112 = vunpack.c.h.b16 %v946
    %v1113 = vunpack.c.l.b16 %v947
    %v1114 = vunpack.c.h.b16 %v947
    %v1115 = vunpack.c.l.b16 %v948
    %v1116 = vunpack.c.h.b16 %v948
    %v1117 = vunpack.c.l.b16 %v949
    %v1118 = vunpack.c.h.b16 %v949
    %v1119 = vunpack.c.l.b16 %v950
    %v1120 = vunpack.c.h.b16 %v950
    %v1121 = vunpack.c.l.b16 %v951
    %v1122 = vunpack.c.h.b16 %v951
    %v1123 = vunpack.c.l.b16 %v952
    %v1124 = vunpack.c.h.b16 %v952
    %v1125 = vunpack.c.l.b16 %v953
    %v1126 = vunpack.c.h.b16 %v953
    %v1127 = vunpack.c.l.b16 %v954
    %v1128 = vunpack.c.h.b16 %v954
    %v1129 = vunpack.c.l.b16 %v955
    %v1130 = vunpack.c.h.b16 %v955
    %v1131 = vunpack.c.l.b16 %v956
    %v1132 = vunpack.c.h.b16 %v956
    %v1133 = vunpack.c.l.b16 %v957
    %v1134 = vunpack.c.h.b16 %v957
    %v1135 = vunpack.c.l.b16 %v958
    %v1136 = vunpack.c.h.b16 %v958
    %v1137 = vunpack.c.l.b16 %v959
    %v1138 = vunpack.c.h.b16 %v959
    %v1139 = vunpack.c.l.b16 %v960
    %v1140 = vunpack.c.h.b16 %v960
    %v1141 = vunpack.c.l.b16 %v961
    %v1142 = vunpack.c.h.b16 %v961
    %v1143 = vunpack.c.l.b16 %v962
    %v1144 = vunpack.c.h.b16 %v962
    %v1145 = vunpack.c.l.b16 %v963
    %v1146 = vunpack.c.h.b16 %v963
    %v1147 = vunpack.c.l.b16 %v964
    %v1148 = vunpack.c.h.b16 %v964
    %v1149 = vunpack.c.l.b16 %v965
    %v1150 = vunpack.c.h.b16 %v965
    %v1151 = vunpack.c.l.b16 %v966
    %v1152 = vunpack.c.h.b16 %v966
    %v1153 = vunpack.c.l.b16 %v967
    %v1154 = vunpack.c.h.b16 %v967
    %v1155 = vunpack.c.l.b16 %v968
    %v1156 = vunpack.c.h.b16 %v968
    %v1157 = vunpack.c.l.b16 %v969
    %v1158 = vunpack.c.h.b16 %v969
    %v1159 = vunpack.c.l.b16 %v970
    %v1160 = vunpack.c.h.b16 %v970
    %v1161 = vunpack.c.l.b16 %v971
    %v1162 = vunpack.c.h.b16 %v971
    %v1163 = vunpack.c.l.b16 %v972
    %v1164 = vunpack.c.h.b16 %v972
    %v1165 = vunpack.c.l.b16 %v973
    %v1166 = vunpack.c.h.b16 %v973
    %v1167 = vunpack.c.l.b16 %v974
    %v1168 = vunpack.c.h.b16 %v974
    %v1169 = vunpack.c.l.b16 %v975
    %v1170 = vunpack.c.h.b16 %v975
    %v1171 = vunpack.c.l.b16 %v976
    %v1172 = vunpack.c.h.b16 %v976
    %v1173 = vunpack.c.l.b16 %v977
    %v1174 = vunpack.c.h.b16 %v977
    %v1175 = vunpack.c.l.b16 %v978
    %v1176 = vunpack.c.h.b16 %v978
    %v1177 = vunpack.c.l.b16 %v979
    %v1178 = vunpack.c.h.b16 %v979
    %v1179 = vunpack.c.l.b16 %v980
    %v1180 = vunpack.c.h.b16 %v980
    %v1181 = vunpack.c.l.b16 %v981
    %v1182 = vunpack.c.h.b16 %v981
    %v1183 = vunpack.c.l.b16 %v982
    %v1184 = vunpack.c.h.b16 %v982
    %v1185 = vunpack.c.l.b16 %v983
    %v1186 = vunpack.c.h.b16 %v983
    %v1187 = vpack.c.b16 %v1063, %v1059
    %v1188 = vpack.c.b16 %v1064, %v1060
    %v1189 = vpack.c.b16 %v1065, %v1061
    %v1190 = vpack.c.b16 %v1066, %v1062
    %v1191 = vpack.c.b16 %v1071, %v1067
    %v1192 = vpack.c.b16 %v1072, %v1068
    %v1193 = vpack.c.b16 %v1073, %v1069
    %v1194 = vpack.c.b16 %v1074, %v1070
    %v1195 = vpack.c.b16 %v1079, %v1075
    %v1196 = vpack.c.b16 %v1080, %v1076
    %v1197 = vpack.c.b16 %v1081, %v1077
    %v1198 = vpack.c.b16 %v1082, %v1078
    %v1199 = vpack.c.b16 %v1087, %v1083
    %v1200 = vpack.c.b16 %v1088, %v1084
    %v1201 = vpack.c.b16 %v1089, %v1085
    %v1202 = vpack.c.b16 %v1090, %v1086
    %v1203 = vpack.c.b16 %v1095, %v1091
    %v1204 = vpack.c.b16 %v1096, %v1092
    %v1205 = vpack.c.b16 %v1097, %v1093
    %v1206 = vpack.c.b16 %v1098, %v1094
    %v1207 = vpack.c.b16 %v1103, %v1099
    %v1208 = vpack.c.b16 %v1104, %v1100
    %v1209 = vpack.c.b16 %v1105, %v1101
    %v1210 = vpack.c.b16 %v1106, %v1102
    %v1211 = vpack.c.b16 %v1111, %v1107
    %v1212 = vpack.c.b16 %v1112, %v1108
    %v1213 = vpack.c.b16 %v1113, %v1109
    %v1214 = vpack.c.b16 %v1114, %v1110
    %v1215 = vpack.c.b16 %v1119, %v1115
    %v1216 = vpack.c.b16 %v1120, %v1116
    %v1217 = vpack.c.b16 %v1121, %v1117
    %v1218 = vpack.c.b16 %v1122, %v1118
    %v1219 = vpack.c.b16 %v1127, %v1123
    %v1220 = vpack.c.b16 %v1128, %v1124
    %v1221 = vpack.c.b16 %v1129, %v1125
    %v1222 = vpack.c.b16 %v1130, %v1126
    %v1223 = vpack.c.b16 %v1135, %v1131
    %v1224 = vpack.c.b16 %v1136, %v1132
    %v1225 = vpack.c.b16 %v1137, %v1133
    %v1226 = vpack.c.b16 %v1138, %v1134
    %v1227 = vpack.c.b16 %v1143, %v1139
    %v1228 = vpack.c.b16 %v1144, %v1140
    %v1229 = vpack.c.b16 %v1145, %v1141
    %v1230 = vpack.c.b16 %v1146, %v1142
    %v1231 = vpack.c.b16 %v1151, %v1147
    %v1232 = vpack.c.b16 %v1152, %v1148
    %v1233 = vpack.c.b16 %v1153, %v1149
    %v1234 = vpack.c.b16 %v1154, %v1150
    %v1235 = vpack.c.b16 %v1159, %v1155
    %v1236 = vpack.c.b16 %v1160, %v1156
    %v1237 = vpack.c.b16 %v1161, %v1157
    %v1238 = vpack.c.b16 %v1162, %v1158
    %v1239 = vpack.c.b16 %v1167, %v1163
    %v1240 = vpack.c.b16 %v1168, %v1164
    %v1241 = vpack.c.b16 %v1169, %v1165
    %v1242 = vpack.c.b16 %v1170, %v1166
    %v1243 = vpack.c.b16 %v1175, %v1171
    %v1244 = vpack.c.b16 %v1176, %v1172
    %v1245 = vpack.c.b16 %v1177, %v1173
    %v1246 = vpack.c.b16 %v1178, %v1174
    %v1247 = vpack.c.b16 %v1183, %v1179
    %v1248 = vpack.c.b16 %v1184, %v1180
    %v1249 = vpack.c.b16 %v1185, %v1181
    %v1250 = vpack.c.b16 %v1186, %v1182
    %1315 = vmatpush.bf16.msra.mxu0 %v1215
    %1316 = vmatpush.bf16.msra.mxu0 %v1211
    %1317 = vmatpush.bf16.msra.mxu0 %v1207
    %1318 = vmatpush.bf16.msra.mxu0 %v1203
    %1319 = vmatpush.bf16.msra.mxu0 %v1199
    %1320 = vmatpush.bf16.msra.mxu0 %v1195
    %1321 = vmatpush.bf16.msra.mxu0 %v1191
    %1322 = vmatpush.bf16.msra.mxu0 %v1187
    %1323 = vmatmul.bf16.gmra.mxu0 %v912
    %v1324 = vpop.f32.mrf.mxu0
    %v1325 = vadd.f32 %v987, %v1324
    %v1326 = vpop.f32.mrf.mxu0
    %v1327 = vadd.f32 %v987, %v1326
    %1328 = vmatmul.bf16.gmra.mxu0 %v914
    %v1329 = vpop.f32.mrf.mxu0
    %v1330 = vadd.f32 %v987, %v1329
    %v1331 = vpop.f32.mrf.mxu0
    %v1332 = vadd.f32 %v987, %v1331
    %1333 = vmatmul.bf16.gmra.mxu0 %v916
    %v1334 = vpop.f32.mrf.mxu0
    %v1335 = vadd.f32 %v987, %v1334
    %v1336 = vpop.f32.mrf.mxu0
    %v1337 = vadd.f32 %v987, %v1336
    %1338 = vmatmul.bf16.gmra.mxu0 %v918
    %v1339 = vpop.f32.mrf.mxu0
    %v1340 = vadd.f32 %v987, %v1339
    %v1341 = vpop.f32.mrf.mxu0
    %v1342 = vadd.f32 %v987, %v1341
    %1343 = vdwg.mxu0
    %1344 = vmatpush.bf16.msra.mxu0 %v1247
    %1345 = vmatpush.bf16.msra.mxu0 %v1243
    %1346 = vmatpush.bf16.msra.mxu0 %v1239
    %1347 = vmatpush.bf16.msra.mxu0 %v1235
    %1348 = vmatpush.bf16.msra.mxu0 %v1231
    %1349 = vmatpush.bf16.msra.mxu0 %v1227
    %1350 = vmatpush.bf16.msra.mxu0 %v1223
    %1351 = vmatpush.bf16.msra.mxu0 %v1219
    %1352 = vmatmul.bf16.gmra.mxu0 %v913
    %v1353 = vpop.f32.mrf.mxu0
    %v1354 = vadd.f32 %v1325, %v1353
    %v1355 = vpop.f32.mrf.mxu0
    %v1356 = vadd.f32 %v1327, %v1355
    %1357 = vmatmul.bf16.gmra.mxu0 %v915
    %v1358 = vpop.f32.mrf.mxu0
    %v1359 = vadd.f32 %v1330, %v1358
    %v1360 = vpop.f32.mrf.mxu0
    %v1361 = vadd.f32 %v1332, %v1360
    %1362 = vmatmul.bf16.gmra.mxu0 %v917
    %v1363 = vpop.f32.mrf.mxu0
    %v1364 = vadd.f32 %v1335, %v1363
    %v1365 = vpop.f32.mrf.mxu0
    %v1366 = vadd.f32 %v1337, %v1365
    %1367 = vmatmul.bf16.gmra.mxu0 %v919
    %v1368 = vpop.f32.mrf.mxu0
    %v1369 = vadd.f32 %v1340, %v1368
    %v1370 = vpop.f32.mrf.mxu0
    %v1371 = vadd.f32 %v1342, %v1370
    %1372 = vdwg.mxu0
    %1373 = vmatpush.bf16.msra.mxu0 %v1216
    %1374 = vmatpush.bf16.msra.mxu0 %v1212
    %1375 = vmatpush.bf16.msra.mxu0 %v1208
    %1376 = vmatpush.bf16.msra.mxu0 %v1204
    %1377 = vmatpush.bf16.msra.mxu0 %v1200
    %1378 = vmatpush.bf16.msra.mxu0 %v1196
    %1379 = vmatpush.bf16.msra.mxu0 %v1192
    %1380 = vmatpush.bf16.msra.mxu0 %v1188
    %1381 = vmatmul.bf16.gmra.mxu0 %v912
    %v1382 = vpop.f32.mrf.mxu0
    %v1383 = vadd.f32 %v988, %v1382
    %v1384 = vpop.f32.mrf.mxu0
    %v1385 = vadd.f32 %v988, %v1384
    %1386 = vmatmul.bf16.gmra.mxu0 %v914
    %v1387 = vpop.f32.mrf.mxu0
    %v1388 = vadd.f32 %v988, %v1387
    %v1389 = vpop.f32.mrf.mxu0
    %v1390 = vadd.f32 %v988, %v1389
    %1391 = vmatmul.bf16.gmra.mxu0 %v916
    %v1392 = vpop.f32.mrf.mxu0
    %v1393 = vadd.f32 %v988, %v1392
    %v1394 = vpop.f32.mrf.mxu0
    %v1395 = vadd.f32 %v988, %v1394
    %1396 = vmatmul.bf16.gmra.mxu0 %v918
    %v1397 = vpop.f32.mrf.mxu0
    %v1398 = vadd.f32 %v988, %v1397
    %v1399 = vpop.f32.mrf.mxu0
    %v1400 = vadd.f32 %v988, %v1399
    %1401 = vdwg.mxu0
    %1402 = vmatpush.bf16.msra.mxu0 %v1248
    %1403 = vmatpush.bf16.msra.mxu0 %v1244
    %1404 = vmatpush.bf16.msra.mxu0 %v1240
    %1405 = vmatpush.bf16.msra.mxu0 %v1236
    %1406 = vmatpush.bf16.msra.mxu0 %v1232
    %1407 = vmatpush.bf16.msra.mxu0 %v1228
    %1408 = vmatpush.bf16.msra.mxu0 %v1224
    %1409 = vmatpush.bf16.msra.mxu0 %v1220
    %1410 = vmatmul.bf16.gmra.mxu0 %v913
    %v1411 = vpop.f32.mrf.mxu0
    %v1412 = vadd.f32 %v1383, %v1411
    %v1413 = vpop.f32.mrf.mxu0
    %v1414 = vadd.f32 %v1385, %v1413
    %1415 = vmatmul.bf16.gmra.mxu0 %v915
    %v1416 = vpop.f32.mrf.mxu0
    %v1417 = vadd.f32 %v1388, %v1416
    %v1418 = vpop.f32.mrf.mxu0
    %v1419 = vadd.f32 %v1390, %v1418
    %1420 = vmatmul.bf16.gmra.mxu0 %v917
    %v1421 = vpop.f32.mrf.mxu0
    %v1422 = vadd.f32 %v1393, %v1421
    %v1423 = vpop.f32.mrf.mxu0
    %v1424 = vadd.f32 %v1395, %v1423
    %1425 = vmatmul.bf16.gmra.mxu0 %v919
    %v1426 = vpop.f32.mrf.mxu0
    %v1427 = vadd.f32 %v1398, %v1426
    %v1428 = vpop.f32.mrf.mxu0
    %v1429 = vadd.f32 %v1400, %v1428
    %1430 = vdwg.mxu0
    %1431 = vmatpush.bf16.msra.mxu0 %v1217
    %1432 = vmatpush.bf16.msra.mxu0 %v1213
    %1433 = vmatpush.bf16.msra.mxu0 %v1209
    %1434 = vmatpush.bf16.msra.mxu0 %v1205
    %1435 = vmatpush.bf16.msra.mxu0 %v1201
    %1436 = vmatpush.bf16.msra.mxu0 %v1197
    %1437 = vmatpush.bf16.msra.mxu0 %v1193
    %1438 = vmatpush.bf16.msra.mxu0 %v1189
    %1439 = vmatmul.bf16.gmra.mxu0 %v912
    %v1440 = vpop.f32.mrf.mxu0
    %v1441 = vadd.f32 %v989, %v1440
    %v1442 = vpop.f32.mrf.mxu0
    %v1443 = vadd.f32 %v989, %v1442
    %1444 = vmatmul.bf16.gmra.mxu0 %v914
    %v1445 = vpop.f32.mrf.mxu0
    %v1446 = vadd.f32 %v989, %v1445
    %v1447 = vpop.f32.mrf.mxu0
    %v1448 = vadd.f32 %v989, %v1447
    %1449 = vmatmul.bf16.gmra.mxu0 %v916
    %v1450 = vpop.f32.mrf.mxu0
    %v1451 = vadd.f32 %v989, %v1450
    %v1452 = vpop.f32.mrf.mxu0
    %v1453 = vadd.f32 %v989, %v1452
    %1454 = vmatmul.bf16.gmra.mxu0 %v918
    %v1455 = vpop.f32.mrf.mxu0
    %v1456 = vadd.f32 %v989, %v1455
    %v1457 = vpop.f32.mrf.mxu0
    %v1458 = vadd.f32 %v989, %v1457
    %1459 = vdwg.mxu0
    %1460 = vmatpush.bf16.msra.mxu0 %v1249
    %1461 = vmatpush.bf16.msra.mxu0 %v1245
    %1462 = vmatpush.bf16.msra.mxu0 %v1241
    %1463 = vmatpush.bf16.msra.mxu0 %v1237
    %1464 = vmatpush.bf16.msra.mxu0 %v1233
    %1465 = vmatpush.bf16.msra.mxu0 %v1229
    %1466 = vmatpush.bf16.msra.mxu0 %v1225
    %1467 = vmatpush.bf16.msra.mxu0 %v1221
    %1468 = vmatmul.bf16.gmra.mxu0 %v913
    %v1469 = vpop.f32.mrf.mxu0
    %v1470 = vadd.f32 %v1441, %v1469
    %v1471 = vpop.f32.mrf.mxu0
    %v1472 = vadd.f32 %v1443, %v1471
    %1473 = vmatmul.bf16.gmra.mxu0 %v915
    %v1474 = vpop.f32.mrf.mxu0
    %v1475 = vadd.f32 %v1446, %v1474
    %v1476 = vpop.f32.mrf.mxu0
    %v1477 = vadd.f32 %v1448, %v1476
    %1478 = vmatmul.bf16.gmra.mxu0 %v917
    %v1479 = vpop.f32.mrf.mxu0
    %v1480 = vadd.f32 %v1451, %v1479
    %v1481 = vpop.f32.mrf.mxu0
    %v1482 = vadd.f32 %v1453, %v1481
    %1483 = vmatmul.bf16.gmra.mxu0 %v919
    %v1484 = vpop.f32.mrf.mxu0
    %v1485 = vadd.f32 %v1456, %v1484
    %v1486 = vpop.f32.mrf.mxu0
    %v1487 = vadd.f32 %v1458, %v1486
    %1488 = vdwg.mxu0
    %1489 = vmatpush.bf16.msra.mxu0 %v1218
    %1490 = vmatpush.bf16.msra.mxu0 %v1214
    %1491 = vmatpush.bf16.msra.mxu0 %v1210
    %1492 = vmatpush.bf16.msra.mxu0 %v1206
    %1493 = vmatpush.bf16.msra.mxu0 %v1202
    %1494 = vmatpush.bf16.msra.mxu0 %v1198
    %1495 = vmatpush.bf16.msra.mxu0 %v1194
    %1496 = vmatpush.bf16.msra.mxu0 %v1190
    %1497 = vmatmul.bf16.gmra.mxu0 %v912
    %v1498 = vpop.f32.mrf.mxu0
    %v1499 = vadd.f32 %v990, %v1498
    %v1500 = vpop.f32.mrf.mxu0
    %v1501 = vadd.f32 %v990, %v1500
    %1502 = vmatmul.bf16.gmra.mxu0 %v914
    %v1503 = vpop.f32.mrf.mxu0
    %v1504 = vadd.f32 %v990, %v1503
    %v1505 = vpop.f32.mrf.mxu0
    %v1506 = vadd.f32 %v990, %v1505
    %1507 = vmatmul.bf16.gmra.mxu0 %v916
    %v1508 = vpop.f32.mrf.mxu0
    %v1509 = vadd.f32 %v990, %v1508
    %v1510 = vpop.f32.mrf.mxu0
    %v1511 = vadd.f32 %v990, %v1510
    %1512 = vmatmul.bf16.gmra.mxu0 %v918
    %v1513 = vpop.f32.mrf.mxu0
    %v1514 = vadd.f32 %v990, %v1513
    %v1515 = vpop.f32.mrf.mxu0
    %v1516 = vadd.f32 %v990, %v1515
    %1517 = vdwg.mxu0
    %1518 = vmatpush.bf16.msra.mxu0 %v1250
    %1519 = vmatpush.bf16.msra.mxu0 %v1246
    %1520 = vmatpush.bf16.msra.mxu0 %v1242
    %1521 = vmatpush.bf16.msra.mxu0 %v1238
    %1522 = vmatpush.bf16.msra.mxu0 %v1234
    %1523 = vmatpush.bf16.msra.mxu0 %v1230
    %1524 = vmatpush.bf16.msra.mxu0 %v1226
    %1525 = vmatpush.bf16.msra.mxu0 %v1222
    %1526 = vmatmul.bf16.gmra.mxu0 %v913
    %v1527 = vpop.f32.mrf.mxu0
    %v1528 = vadd.f32 %v1499, %v1527
    %v1529 = vpop.f32.mrf.mxu0
    %v1530 = vadd.f32 %v1501, %v1529
    %1531 = vmatmul.bf16.gmra.mxu0 %v915
    %v1532 = vpop.f32.mrf.mxu0
    %v1533 = vadd.f32 %v1504, %v1532
    %v1534 = vpop.f32.mrf.mxu0
    %v1535 = vadd.f32 %v1506, %v1534
    %1536 = vmatmul.bf16.gmra.mxu0 %v917
    %v1537 = vpop.f32.mrf.mxu0
    %v1538 = vadd.f32 %v1509, %v1537
    %v1539 = vpop.f32.mrf.mxu0
    %v1540 = vadd.f32 %v1511, %v1539
    %1541 = vmatmul.bf16.gmra.mxu0 %v919
    %v1542 = vpop.f32.mrf.mxu0
    %v1543 = vadd.f32 %v1514, %v1542
    %v1544 = vpop.f32.mrf.mxu0
    %v1545 = vadd.f32 %v1516, %v1544
    %1546 = vdwg.mxu0
    %v1547 = vtanh.pop %v1354
    %v1548 = vtanh.pop %v1412
    %v1549 = vtanh.pop %v1470
    %v1550 = vtanh.pop %v1528
    %v1551 = vtanh.pop %v1356
    %v1552 = vtanh.pop %v1414
    %v1553 = vtanh.pop %v1472
    %v1554 = vtanh.pop %v1530
    %v1555 = vtanh.pop %v1359
    %v1556 = vtanh.pop %v1417
    %v1557 = vtanh.pop %v1475
    %v1558 = vtanh.pop %v1533
    %v1559 = vtanh.pop %v1361
    %v1560 = vtanh.pop %v1419
    %v1561 = vtanh.pop %v1477
    %v1562 = vtanh.pop %v1535
    %v1563 = vtanh.pop %v1364
    %v1564 = vtanh.pop %v1422
    %v1565 = vtanh.pop %v1480
    %v1566 = vtanh.pop %v1538
    %v1567 = vtanh.pop %v1366
    %v1568 = vtanh.pop %v1424
    %v1569 = vtanh.pop %v1482
    %v1570 = vtanh.pop %v1540
    %v1571 = vtanh.pop %v1369
    %v1572 = vtanh.pop %v1427
    %v1573 = vtanh.pop %v1485
    %v1574 = vtanh.pop %v1543
    %v1575 = vtanh.pop %v1371
    %v1576 = vtanh.pop %v1429
    %v1577 = vtanh.pop %v1487
    %v1578 = vtanh.pop %v1545
    %1579 = vst [vmem:[%s7] sm:$0xff] %v1547
    %1580 = vst [vmem:[%s7 + $0x8] sm:$0xff] %v1548
    %1581 = vst [vmem:[%s7 + $0x10] sm:$0xff] %v1549
    %1582 = vst [vmem:[%s7 + $0x18] sm:$0xff] %v1550
    %1583 = vst [vmem:[%s7 + $0x20] sm:$0xff] %v1551
    %1584 = vst [vmem:[%s7 + $0x28] sm:$0xff] %v1552
    %1585 = vst [vmem:[%s7 + $0x30] sm:$0xff] %v1553
    %1586 = vst [vmem:[%s7 + $0x38] sm:$0xff] %v1554
    %1587 = vst [vmem:[%s7 + $0x40] sm:$0xff] %v1555
    %1588 = vst [vmem:[%s7 + $0x48] sm:$0xff] %v1556
    %1589 = vst [vmem:[%s7 + $0x50] sm:$0xff] %v1557
    %1590 = vst [vmem:[%s7 + $0x58] sm:$0xff] %v1558
    %1591 = vst [vmem:[%s7 + $0x60] sm:$0xff] %v1559
    %1592 = vst [vmem:[%s7 + $0x68] sm:$0xff] %v1560
    %1593 = vst [vmem:[%s7 + $0x70] sm:$0xff] %v1561
    %1594 = vst [vmem:[%s7 + $0x78] sm:$0xff] %v1562
    %1595 = vst [vmem:[%s7 + $0x80] sm:$0xff] %v1563
    %1596 = vst [vmem:[%s7 + $0x88] sm:$0xff] %v1564
    %1597 = vst [vmem:[%s7 + $0x90] sm:$0xff] %v1565
    %1598 = vst [vmem:[%s7 + $0x98] sm:$0xff] %v1566
    %1599 = vst [vmem:[%s7 + $0xa0] sm:$0xff] %v1567
    %1600 = vst [vmem:[%s7 + $0xa8] sm:$0xff] %v1568
    %1601 = vst [vmem:[%s7 + $0xb0] sm:$0xff] %v1569
    %1602 = vst [vmem:[%s7 + $0xb8] sm:$0xff] %v1570
    %1603 = vst [vmem:[%s7 + $0xc0] sm:$0xff] %v1571
    %1604 = vst [vmem:[%s7 + $0xc8] sm:$0xff] %v1572
    %1605 = vst [vmem:[%s7 + $0xd0] sm:$0xff] %v1573
    %1606 = vst [vmem:[%s7 + $0xd8] sm:$0xff] %v1574
    %1607 = vst [vmem:[%s7 + $0xe0] sm:$0xff] %v1575
    %1608 = vst [vmem:[%s7 + $0xe8] sm:$0xff] %v1576
    %1609 = vst [vmem:[%s7 + $0xf0] sm:$0xff] %v1577
    %1610 = vst [vmem:[%s7 + $0xf8] sm:$0xff] %v1578
    // Predicated region
    $region38: #{generator_forward.1} parent=1 // pred_check
      _
    $region39: #{generator_forward.1} parent=1 // pred_check_branch
      %1612 = sbr.rel (0) target = $region41
    $region40: #{generator_forward.1} parent=1 // pred_region
      _
    $region41: #{generator_forward.1} parent=1 // pred_fallthru
      _
    // Predicated region
    $region42: #{generator_forward.1} parent=1 // pred_check
      _
    $region43: #{generator_forward.1} parent=1 // pred_check_branch
      %1614 = sbr.rel (0) target = $region45
    $region44: #{generator_forward.1} parent=1 // pred_region
      _
    $region45: #{generator_forward.1} parent=1 // pred_fallthru
      _
    %1615 = vsyncpa [#allocation3], 1
    %1616 = vsyncpa [#allocation5], 1

</llo_original>
